<compile_context>
chip_gen: v5e
topology: v5e:2x2
jax: 0.10.0
libtpu: 0.0.40
codegen_flags: <defaults>
</compile_context>

<pallas_src>
import functools

import jax
import jax.numpy as jnp
import numpy as np
from jax.experimental import pallas as pl
from jax.experimental.pallas import tpu as pltpu  # noqa: F401  (kept for TPU-specific extensions)


def lstm_dense_kernel(x_ref,      # (T*Bp, I)   f32  time-major flattened input
                      w_in_ref,   # (I, 16H)    f32  fused input->gates weights
                      w_rec_ref,  # (4H, 16H)   f32  fused recurrent weights (rows [H,4H) zero)
                      b_ref,      # (1, 16H)    f32  fused gate bias
                      w_out_ref,  # (4H, O)     f32  dense weights (rows [H,4H) zero)
                      b_out_ref,  # (1, O)      f32
                      out_ref,    # (Bp, O)     f32
                      *, seq_len, batch):
    T, Bp = seq_len, batch
    H4 = w_rec_ref.shape[0]          # carried-state lane width (4H)

    w_rec = w_rec_ref[...]

    # (1) Hoisted input projection: one large MXU op + bias for all timesteps.
    xproj = (jnp.dot(x_ref[...], w_in_ref[...],
                     preferred_element_type=jnp.float32)
             + b_ref[...])                               # (T*Bp, 16H)

    # Carried state is 4H lanes wide; true h/c live in lanes [0, H).  The other
    # lanes see zero weights/bias (pre-activation exactly 0) so they stay bounded
    # and are never read downstream (zero rows in w_rec / w_out).
    h = jnp.zeros((Bp, H4), jnp.float32)
    c = jnp.zeros((Bp, H4), jnp.float32)

    # (2) Fully unrolled recurrence (single traced region; T is static & small).
    for t in range(T):
        gates = xproj[t * Bp:(t + 1) * Bp, :] + jnp.dot(
            h, w_rec, preferred_element_type=jnp.float32)      # (Bp, 16H)
        # Four lane-aligned gate blocks of width 4H each: [i | f | g | o].
        i = jax.nn.sigmoid(gates[:, 0 * H4:1 * H4])
        f = jax.nn.sigmoid(gates[:, 1 * H4:2 * H4])
        g = jnp.tanh(gates[:, 2 * H4:3 * H4])
        o = jax.nn.sigmoid(gates[:, 3 * H4:4 * H4])
        c = f * c + i * g
        h = o * jnp.tanh(c)

    # dropout(p=0.2) is identity at inference.
    # TODO(synk): training-mode dropout (Bernoulli mask via pltpu.prng_*) not emitted.
    # (3) Final dense directly off the last unrolled step.
    out_ref[...] = (jnp.dot(h, w_out_ref[...], preferred_element_type=jnp.float32)
                    + b_out_ref[...])


def music_model_forward(x, packed_params):
    """x: (B, T, input_size) f32  ->  (B, output_size) f32   (inference forward)."""
    W_in, U_rec, b_gates, W_out, b_out = packed_params
    B, T, I = x.shape
    O = W_out.shape[1]

    # Pad batch to the f32 sublane width (8); padded rows are independent and dropped.
    Bp = ((B + 7) // 8) * 8
    xt = jnp.transpose(x, (1, 0, 2))                 # (T, B, I)  time-major (tiny copy)
    if Bp != B:
        xt = jnp.pad(xt, ((0, 0), (0, Bp - B), (0, 0)))
    x2d = xt.reshape(T * Bp, I)                      # contiguous 2-D slab

    out = pl.pallas_call(
        functools.partial(lstm_dense_kernel, seq_len=T, batch=Bp),
        out_shape=jax.ShapeDtypeStruct((Bp, O), jnp.float32),
    )(x2d, W_in, U_rec, b_gates, W_out, b_out)
    return out[:B]


def pack_params(w_ih, w_hh, b_ih, b_hh, w_dense, b_dense):
    """PyTorch-layout params -> fused kernel layout.

    torch gate row order in weight_ih/weight_hh/biases is [i | f | g | o] (H rows each).
    Kernel gate column layout: four blocks of 4H lanes each,
        block k (k in {i,f,g,o}) = [ W_k (·,H) | zeros (·,3H) ]
    Recurrent / output weights get zero rows for the 3H unused state lanes.
    """
    H4t, I = w_ih.shape
    H = H4t // 4
    O = w_dense.shape[0]
    f32 = jnp.float32
    b_fused = (b_ih + b_hh).astype(f32)

    def in_block(k):                       # (I, 4H)
        return jnp.concatenate(
            [w_ih[k * H:(k + 1) * H, :].T.astype(f32), jnp.zeros((I, 3 * H), f32)], axis=1)

    def rec_block(k):                      # (H, 4H)
        return jnp.concatenate(
            [w_hh[k * H:(k + 1) * H, :].T.astype(f32), jnp.zeros((H, 3 * H), f32)], axis=1)

    def b_block(k):                        # (4H,)
        return jnp.concatenate([b_fused[k * H:(k + 1) * H], jnp.zeros((3 * H,), f32)])

    W_in = jnp.concatenate([in_block(k) for k in range(4)], axis=1)        # (I, 16H)
    U_top = jnp.concatenate([rec_block(k) for k in range(4)], axis=1)      # (H, 16H)
    U_rec = jnp.concatenate([U_top, jnp.zeros((3 * H, 16 * H), f32)], axis=0)   # (4H, 16H)
    b_gates = jnp.concatenate([b_block(k) for k in range(4)])[None, :]     # (1, 16H)
    W_out = jnp.concatenate([w_dense.T.astype(f32),
                             jnp.zeros((3 * H, O), f32)], axis=0)          # (4H, O)
    return W_in, U_rec, b_gates, W_out, b_dense.astype(f32)[None, :]


def init_torch_params(key, input_size, hidden_size, output_size):
    """Deterministic init matching PyTorch param shapes (uniform +-1/sqrt(H))."""
    ks = jax.random.split(key, 6)
    bound = 1.0 / (hidden_size ** 0.5)
    u = lambda k, shape: jax.random.uniform(k, shape, jnp.float32, -bound, bound)
    w_ih = u(ks[0], (4 * hidden_size, input_size))   # torch lstm.weight_ih_l0
    w_hh = u(ks[1], (4 * hidden_size, hidden_size))  # torch lstm.weight_hh_l0
    b_ih = u(ks[2], (4 * hidden_size,))
    b_hh = u(ks[3], (4 * hidden_size,))
    w_dense = u(ks[4], (output_size, hidden_size))   # torch dense.weight
    b_dense = u(ks[5], (output_size,))
    return w_ih, w_hh, b_ih, b_hh, w_dense, b_dense


def reference_forward(x, torch_params):
    """Pure-JAX reference of MusicModel.forward (inference)."""
    w_ih, w_hh, b_ih, b_hh, w_dense, b_dense = torch_params
    B, T, _ = x.shape
    H = w_hh.shape[1]
    hp = jax.lax.Precision.HIGHEST
    h = jnp.zeros((B, H), jnp.float32)
    c = jnp.zeros((B, H), jnp.float32)
    for t in range(T):
        z = (jnp.dot(x[:, t, :], w_ih.T, precision=hp) + b_ih
             + jnp.dot(h, w_hh.T, precision=hp) + b_hh)
        i = jax.nn.sigmoid(z[:, 0 * H:1 * H])
        f = jax.nn.sigmoid(z[:, 1 * H:2 * H])
        g = jnp.tanh(z[:, 2 * H:3 * H])
        o = jax.nn.sigmoid(z[:, 3 * H:4 * H])
        c = f * c + i * g
        h = o * jnp.tanh(c)
    return jnp.dot(h, w_dense.T, precision=hp) + b_dense


if __name__ == "__main__":
    B, T = 2, 8                 # batch, sequence length
    input_size, hidden_size, output_size = 16, 32, 16

    key = jax.random.PRNGKey(0)
    k_x, k_p = jax.random.split(key)
    x = jax.random.normal(k_x, (B, T, input_size), jnp.float32)
    torch_params = init_torch_params(k_p, input_size, hidden_size, output_size)
    packed = pack_params(*torch_params)

    out = music_model_forward(x, packed)
    jax.block_until_ready(out)
    assert out.shape == (B, output_size)

    ref = reference_forward(x, torch_params)
    np.testing.assert_allclose(np.asarray(out), np.asarray(ref), rtol=2e-3, atol=2e-3)
    print("KERNEL_OK")
</pallas_src>

<mosaic_0001>
module attributes {stable_mosaic.version = 11 : i64} {
  func.func @lstm_dense_kernel(%arg0: memref<64x16xf32, #tpu.memory_space<vmem>>, %arg1: memref<16x512xf32, #tpu.memory_space<vmem>>, %arg2: memref<128x512xf32, #tpu.memory_space<vmem>>, %arg3: memref<1x512xf32, #tpu.memory_space<vmem>>, %arg4: memref<128x16xf32, #tpu.memory_space<vmem>>, %arg5: memref<1x16xf32, #tpu.memory_space<vmem>>, %arg6: memref<8x16xf32, #tpu.memory_space<vmem>>) attributes {dimension_semantics = [], scalar_prefetch = 0 : i64, scratch_operands = 0 : i64, tpu.core_type = #tpu.core_type<tc>} {
    %c0 = arith.constant 0 : index
    %c0_0 = arith.constant 0 : index
    %0 = vector.load %arg2[%c0, %c0_0] : memref<128x512xf32, #tpu.memory_space<vmem>>, vector<128x512xf32>
    %c0_1 = arith.constant 0 : index
    %c0_2 = arith.constant 0 : index
    %1 = vector.load %arg0[%c0_1, %c0_2] : memref<64x16xf32, #tpu.memory_space<vmem>>, vector<64x16xf32>
    %c0_3 = arith.constant 0 : index
    %c0_4 = arith.constant 0 : index
    %2 = vector.load %arg1[%c0_3, %c0_4] : memref<16x512xf32, #tpu.memory_space<vmem>>, vector<16x512xf32>
    %cst = arith.constant dense<0.000000e+00> : vector<64x512xf32>
    %3 = tpu.matmul %1, %2, %cst {dimension_numbers = #tpu.dot_dimension_numbers<[1], [0], [0], [1], [0, 0, 1, 1], [], []>} : vector<64x16xf32>, vector<16x512xf32>, vector<64x512xf32> -> vector<64x512xf32>
    %c0_5 = arith.constant 0 : index
    %c0_6 = arith.constant 0 : index
    %4 = vector.load %arg3[%c0_5, %c0_6] : memref<1x512xf32, #tpu.memory_space<vmem>>, vector<1x512xf32>
    %5 = vector.broadcast %4 : vector<1x512xf32> to vector<64x512xf32>
    %6 = arith.addf %3, %5 : vector<64x512xf32>
    %cst_7 = arith.constant 0.000000e+00 : f32
    %7 = vector.broadcast %cst_7 : f32 to vector<8x128xf32>
    %cst_8 = arith.constant 0.000000e+00 : f32
    %8 = vector.broadcast %cst_8 : f32 to vector<8x128xf32>
    %9 = vector.extract_strided_slice %6 {offsets = [0, 0], sizes = [8, 512], strides = [1, 1]} : vector<64x512xf32> to vector<8x512xf32>
    %cst_9 = arith.constant dense<0.000000e+00> : vector<8x512xf32>
    %10 = tpu.matmul %7, %0, %cst_9 {dimension_numbers = #tpu.dot_dimension_numbers<[1], [0], [0], [1], [0, 0, 1, 1], [], []>} : vector<8x128xf32>, vector<128x512xf32>, vector<8x512xf32> -> vector<8x512xf32>
    %11 = arith.addf %9, %10 : vector<8x512xf32>
    %12 = vector.extract_strided_slice %11 {offsets = [0, 0], sizes = [8, 128], strides = [1, 1]} : vector<8x512xf32> to vector<8x128xf32>
    %13 = arith.negf %12 : vector<8x128xf32>
    %14 = math.exp %13 : vector<8x128xf32>
    %cst_10 = arith.constant 1.000000e+00 : f32
    %15 = vector.broadcast %cst_10 : f32 to vector<8x128xf32>
    %16 = arith.addf %15, %14 : vector<8x128xf32>
    %17 = arith.divf %15, %16 : vector<8x128xf32>
    %18 = vector.extract_strided_slice %11 {offsets = [0, 128], sizes = [8, 128], strides = [1, 1]} : vector<8x512xf32> to vector<8x128xf32>
    %19 = arith.negf %18 : vector<8x128xf32>
    %20 = math.exp %19 : vector<8x128xf32>
    %cst_11 = arith.constant 1.000000e+00 : f32
    %21 = vector.broadcast %cst_11 : f32 to vector<8x128xf32>
    %22 = arith.addf %21, %20 : vector<8x128xf32>
    %23 = arith.divf %21, %22 : vector<8x128xf32>
    %24 = vector.extract_strided_slice %11 {offsets = [0, 256], sizes = [8, 128], strides = [1, 1]} : vector<8x512xf32> to vector<8x128xf32>
    %25 = math.tanh %24 : vector<8x128xf32>
    %26 = vector.extract_strided_slice %11 {offsets = [0, 384], sizes = [8, 128], strides = [1, 1]} : vector<8x512xf32> to vector<8x128xf32>
    %27 = arith.negf %26 : vector<8x128xf32>
    %28 = math.exp %27 : vector<8x128xf32>
    %cst_12 = arith.constant 1.000000e+00 : f32
    %29 = vector.broadcast %cst_12 : f32 to vector<8x128xf32>
    %30 = arith.addf %29, %28 : vector<8x128xf32>
    %31 = arith.divf %29, %30 : vector<8x128xf32>
    %32 = arith.mulf %23, %8 : vector<8x128xf32>
    %33 = arith.mulf %17, %25 : vector<8x128xf32>
    %34 = arith.addf %32, %33 : vector<8x128xf32>
    %35 = math.tanh %34 : vector<8x128xf32>
    %36 = arith.mulf %31, %35 : vector<8x128xf32>
    %37 = vector.extract_strided_slice %6 {offsets = [8, 0], sizes = [8, 512], strides = [1, 1]} : vector<64x512xf32> to vector<8x512xf32>
    %cst_13 = arith.constant dense<0.000000e+00> : vector<8x512xf32>
    %38 = tpu.matmul %36, %0, %cst_13 {dimension_numbers = #tpu.dot_dimension_numbers<[1], [0], [0], [1], [0, 0, 1, 1], [], []>} : vector<8x128xf32>, vector<128x512xf32>, vector<8x512xf32> -> vector<8x512xf32>
    %39 = arith.addf %37, %38 : vector<8x512xf32>
    %40 = vector.extract_strided_slice %39 {offsets = [0, 0], sizes = [8, 128], strides = [1, 1]} : vector<8x512xf32> to vector<8x128xf32>
    %41 = arith.negf %40 : vector<8x128xf32>
    %42 = math.exp %41 : vector<8x128xf32>
    %cst_14 = arith.constant 1.000000e+00 : f32
    %43 = vector.broadcast %cst_14 : f32 to vector<8x128xf32>
    %44 = arith.addf %43, %42 : vector<8x128xf32>
    %45 = arith.divf %43, %44 : vector<8x128xf32>
    %46 = vector.extract_strided_slice %39 {offsets = [0, 128], sizes = [8, 128], strides = [1, 1]} : vector<8x512xf32> to vector<8x128xf32>
    %47 = arith.negf %46 : vector<8x128xf32>
    %48 = math.exp %47 : vector<8x128xf32>
    %cst_15 = arith.constant 1.000000e+00 : f32
    %49 = vector.broadcast %cst_15 : f32 to vector<8x128xf32>
    %50 = arith.addf %49, %48 : vector<8x128xf32>
    %51 = arith.divf %49, %50 : vector<8x128xf32>
    %52 = vector.extract_strided_slice %39 {offsets = [0, 256], sizes = [8, 128], strides = [1, 1]} : vector<8x512xf32> to vector<8x128xf32>
    %53 = math.tanh %52 : vector<8x128xf32>
    %54 = vector.extract_strided_slice %39 {offsets = [0, 384], sizes = [8, 128], strides = [1, 1]} : vector<8x512xf32> to vector<8x128xf32>
    %55 = arith.negf %54 : vector<8x128xf32>
    %56 = math.exp %55 : vector<8x128xf32>
    %cst_16 = arith.constant 1.000000e+00 : f32
    %57 = vector.broadcast %cst_16 : f32 to vector<8x128xf32>
    %58 = arith.addf %57, %56 : vector<8x128xf32>
    %59 = arith.divf %57, %58 : vector<8x128xf32>
    %60 = arith.mulf %51, %34 : vector<8x128xf32>
    %61 = arith.mulf %45, %53 : vector<8x128xf32>
    %62 = arith.addf %60, %61 : vector<8x128xf32>
    %63 = math.tanh %62 : vector<8x128xf32>
    %64 = arith.mulf %59, %63 : vector<8x128xf32>
    %65 = vector.extract_strided_slice %6 {offsets = [16, 0], sizes = [8, 512], strides = [1, 1]} : vector<64x512xf32> to vector<8x512xf32>
    %cst_17 = arith.constant dense<0.000000e+00> : vector<8x512xf32>
    %66 = tpu.matmul %64, %0, %cst_17 {dimension_numbers = #tpu.dot_dimension_numbers<[1], [0], [0], [1], [0, 0, 1, 1], [], []>} : vector<8x128xf32>, vector<128x512xf32>, vector<8x512xf32> -> vector<8x512xf32>
    %67 = arith.addf %65, %66 : vector<8x512xf32>
    %68 = vector.extract_strided_slice %67 {offsets = [0, 0], sizes = [8, 128], strides = [1, 1]} : vector<8x512xf32> to vector<8x128xf32>
    %69 = arith.negf %68 : vector<8x128xf32>
    %70 = math.exp %69 : vector<8x128xf32>
    %cst_18 = arith.constant 1.000000e+00 : f32
    %71 = vector.broadcast %cst_18 : f32 to vector<8x128xf32>
    %72 = arith.addf %71, %70 : vector<8x128xf32>
    %73 = arith.divf %71, %72 : vector<8x128xf32>
    %74 = vector.extract_strided_slice %67 {offsets = [0, 128], sizes = [8, 128], strides = [1, 1]} : vector<8x512xf32> to vector<8x128xf32>
    %75 = arith.negf %74 : vector<8x128xf32>
    %76 = math.exp %75 : vector<8x128xf32>
    %cst_19 = arith.constant 1.000000e+00 : f32
    %77 = vector.broadcast %cst_19 : f32 to vector<8x128xf32>
    %78 = arith.addf %77, %76 : vector<8x128xf32>
    %79 = arith.divf %77, %78 : vector<8x128xf32>
    %80 = vector.extract_strided_slice %67 {offsets = [0, 256], sizes = [8, 128], strides = [1, 1]} : vector<8x512xf32> to vector<8x128xf32>
    %81 = math.tanh %80 : vector<8x128xf32>
    %82 = vector.extract_strided_slice %67 {offsets = [0, 384], sizes = [8, 128], strides = [1, 1]} : vector<8x512xf32> to vector<8x128xf32>
    %83 = arith.negf %82 : vector<8x128xf32>
    %84 = math.exp %83 : vector<8x128xf32>
    %cst_20 = arith.constant 1.000000e+00 : f32
    %85 = vector.broadcast %cst_20 : f32 to vector<8x128xf32>
    %86 = arith.addf %85, %84 : vector<8x128xf32>
    %87 = arith.divf %85, %86 : vector<8x128xf32>
    %88 = arith.mulf %79, %62 : vector<8x128xf32>
    %89 = arith.mulf %73, %81 : vector<8x128xf32>
    %90 = arith.addf %88, %89 : vector<8x128xf32>
    %91 = math.tanh %90 : vector<8x128xf32>
    %92 = arith.mulf %87, %91 : vector<8x128xf32>
    %93 = vector.extract_strided_slice %6 {offsets = [24, 0], sizes = [8, 512], strides = [1, 1]} : vector<64x512xf32> to vector<8x512xf32>
    %cst_21 = arith.constant dense<0.000000e+00> : vector<8x512xf32>
    %94 = tpu.matmul %92, %0, %cst_21 {dimension_numbers = #tpu.dot_dimension_numbers<[1], [0], [0], [1], [0, 0, 1, 1], [], []>} : vector<8x128xf32>, vector<128x512xf32>, vector<8x512xf32> -> vector<8x512xf32>
    %95 = arith.addf %93, %94 : vector<8x512xf32>
    %96 = vector.extract_strided_slice %95 {offsets = [0, 0], sizes = [8, 128], strides = [1, 1]} : vector<8x512xf32> to vector<8x128xf32>
    %97 = arith.negf %96 : vector<8x128xf32>
    %98 = math.exp %97 : vector<8x128xf32>
    %cst_22 = arith.constant 1.000000e+00 : f32
    %99 = vector.broadcast %cst_22 : f32 to vector<8x128xf32>
    %100 = arith.addf %99, %98 : vector<8x128xf32>
    %101 = arith.divf %99, %100 : vector<8x128xf32>
    %102 = vector.extract_strided_slice %95 {offsets = [0, 128], sizes = [8, 128], strides = [1, 1]} : vector<8x512xf32> to vector<8x128xf32>
    %103 = arith.negf %102 : vector<8x128xf32>
    %104 = math.exp %103 : vector<8x128xf32>
    %cst_23 = arith.constant 1.000000e+00 : f32
    %105 = vector.broadcast %cst_23 : f32 to vector<8x128xf32>
    %106 = arith.addf %105, %104 : vector<8x128xf32>
    %107 = arith.divf %105, %106 : vector<8x128xf32>
    %108 = vector.extract_strided_slice %95 {offsets = [0, 256], sizes = [8, 128], strides = [1, 1]} : vector<8x512xf32> to vector<8x128xf32>
    %109 = math.tanh %108 : vector<8x128xf32>
    %110 = vector.extract_strided_slice %95 {offsets = [0, 384], sizes = [8, 128], strides = [1, 1]} : vector<8x512xf32> to vector<8x128xf32>
    %111 = arith.negf %110 : vector<8x128xf32>
    %112 = math.exp %111 : vector<8x128xf32>
    %cst_24 = arith.constant 1.000000e+00 : f32
    %113 = vector.broadcast %cst_24 : f32 to vector<8x128xf32>
    %114 = arith.addf %113, %112 : vector<8x128xf32>
    %115 = arith.divf %113, %114 : vector<8x128xf32>
    %116 = arith.mulf %107, %90 : vector<8x128xf32>
    %117 = arith.mulf %101, %109 : vector<8x128xf32>
    %118 = arith.addf %116, %117 : vector<8x128xf32>
    %119 = math.tanh %118 : vector<8x128xf32>
    %120 = arith.mulf %115, %119 : vector<8x128xf32>
    %121 = vector.extract_strided_slice %6 {offsets = [32, 0], sizes = [8, 512], strides = [1, 1]} : vector<64x512xf32> to vector<8x512xf32>
    %cst_25 = arith.constant dense<0.000000e+00> : vector<8x512xf32>
    %122 = tpu.matmul %120, %0, %cst_25 {dimension_numbers = #tpu.dot_dimension_numbers<[1], [0], [0], [1], [0, 0, 1, 1], [], []>} : vector<8x128xf32>, vector<128x512xf32>, vector<8x512xf32> -> vector<8x512xf32>
    %123 = arith.addf %121, %122 : vector<8x512xf32>
    %124 = vector.extract_strided_slice %123 {offsets = [0, 0], sizes = [8, 128], strides = [1, 1]} : vector<8x512xf32> to vector<8x128xf32>
    %125 = arith.negf %124 : vector<8x128xf32>
    %126 = math.exp %125 : vector<8x128xf32>
    %cst_26 = arith.constant 1.000000e+00 : f32
    %127 = vector.broadcast %cst_26 : f32 to vector<8x128xf32>
    %128 = arith.addf %127, %126 : vector<8x128xf32>
    %129 = arith.divf %127, %128 : vector<8x128xf32>
    %130 = vector.extract_strided_slice %123 {offsets = [0, 128], sizes = [8, 128], strides = [1, 1]} : vector<8x512xf32> to vector<8x128xf32>
    %131 = arith.negf %130 : vector<8x128xf32>
    %132 = math.exp %131 : vector<8x128xf32>
    %cst_27 = arith.constant 1.000000e+00 : f32
    %133 = vector.broadcast %cst_27 : f32 to vector<8x128xf32>
    %134 = arith.addf %133, %132 : vector<8x128xf32>
    %135 = arith.divf %133, %134 : vector<8x128xf32>
    %136 = vector.extract_strided_slice %123 {offsets = [0, 256], sizes = [8, 128], strides = [1, 1]} : vector<8x512xf32> to vector<8x128xf32>
    %137 = math.tanh %136 : vector<8x128xf32>
    %138 = vector.extract_strided_slice %123 {offsets = [0, 384], sizes = [8, 128], strides = [1, 1]} : vector<8x512xf32> to vector<8x128xf32>
    %139 = arith.negf %138 : vector<8x128xf32>
    %140 = math.exp %139 : vector<8x128xf32>
    %cst_28 = arith.constant 1.000000e+00 : f32
    %141 = vector.broadcast %cst_28 : f32 to vector<8x128xf32>
    %142 = arith.addf %141, %140 : vector<8x128xf32>
    %143 = arith.divf %141, %142 : vector<8x128xf32>
    %144 = arith.mulf %135, %118 : vector<8x128xf32>
    %145 = arith.mulf %129, %137 : vector<8x128xf32>
    %146 = arith.addf %144, %145 : vector<8x128xf32>
    %147 = math.tanh %146 : vector<8x128xf32>
    %148 = arith.mulf %143, %147 : vector<8x128xf32>
    %149 = vector.extract_strided_slice %6 {offsets = [40, 0], sizes = [8, 512], strides = [1, 1]} : vector<64x512xf32> to vector<8x512xf32>
    %cst_29 = arith.constant dense<0.000000e+00> : vector<8x512xf32>
    %150 = tpu.matmul %148, %0, %cst_29 {dimension_numbers = #tpu.dot_dimension_numbers<[1], [0], [0], [1], [0, 0, 1, 1], [], []>} : vector<8x128xf32>, vector<128x512xf32>, vector<8x512xf32> -> vector<8x512xf32>
    %151 = arith.addf %149, %150 : vector<8x512xf32>
    %152 = vector.extract_strided_slice %151 {offsets = [0, 0], sizes = [8, 128], strides = [1, 1]} : vector<8x512xf32> to vector<8x128xf32>
    %153 = arith.negf %152 : vector<8x128xf32>
    %154 = math.exp %153 : vector<8x128xf32>
    %cst_30 = arith.constant 1.000000e+00 : f32
    %155 = vector.broadcast %cst_30 : f32 to vector<8x128xf32>
    %156 = arith.addf %155, %154 : vector<8x128xf32>
    %157 = arith.divf %155, %156 : vector<8x128xf32>
    %158 = vector.extract_strided_slice %151 {offsets = [0, 128], sizes = [8, 128], strides = [1, 1]} : vector<8x512xf32> to vector<8x128xf32>
    %159 = arith.negf %158 : vector<8x128xf32>
    %160 = math.exp %159 : vector<8x128xf32>
    %cst_31 = arith.constant 1.000000e+00 : f32
    %161 = vector.broadcast %cst_31 : f32 to vector<8x128xf32>
    %162 = arith.addf %161, %160 : vector<8x128xf32>
    %163 = arith.divf %161, %162 : vector<8x128xf32>
    %164 = vector.extract_strided_slice %151 {offsets = [0, 256], sizes = [8, 128], strides = [1, 1]} : vector<8x512xf32> to vector<8x128xf32>
    %165 = math.tanh %164 : vector<8x128xf32>
    %166 = vector.extract_strided_slice %151 {offsets = [0, 384], sizes = [8, 128], strides = [1, 1]} : vector<8x512xf32> to vector<8x128xf32>
    %167 = arith.negf %166 : vector<8x128xf32>
    %168 = math.exp %167 : vector<8x128xf32>
    %cst_32 = arith.constant 1.000000e+00 : f32
    %169 = vector.broadcast %cst_32 : f32 to vector<8x128xf32>
    %170 = arith.addf %169, %168 : vector<8x128xf32>
    %171 = arith.divf %169, %170 : vector<8x128xf32>
    %172 = arith.mulf %163, %146 : vector<8x128xf32>
    %173 = arith.mulf %157, %165 : vector<8x128xf32>
    %174 = arith.addf %172, %173 : vector<8x128xf32>
    %175 = math.tanh %174 : vector<8x128xf32>
    %176 = arith.mulf %171, %175 : vector<8x128xf32>
    %177 = vector.extract_strided_slice %6 {offsets = [48, 0], sizes = [8, 512], strides = [1, 1]} : vector<64x512xf32> to vector<8x512xf32>
    %cst_33 = arith.constant dense<0.000000e+00> : vector<8x512xf32>
    %178 = tpu.matmul %176, %0, %cst_33 {dimension_numbers = #tpu.dot_dimension_numbers<[1], [0], [0], [1], [0, 0, 1, 1], [], []>} : vector<8x128xf32>, vector<128x512xf32>, vector<8x512xf32> -> vector<8x512xf32>
    %179 = arith.addf %177, %178 : vector<8x512xf32>
    %180 = vector.extract_strided_slice %179 {offsets = [0, 0], sizes = [8, 128], strides = [1, 1]} : vector<8x512xf32> to vector<8x128xf32>
    %181 = arith.negf %180 : vector<8x128xf32>
    %182 = math.exp %181 : vector<8x128xf32>
    %cst_34 = arith.constant 1.000000e+00 : f32
    %183 = vector.broadcast %cst_34 : f32 to vector<8x128xf32>
    %184 = arith.addf %183, %182 : vector<8x128xf32>
    %185 = arith.divf %183, %184 : vector<8x128xf32>
    %186 = vector.extract_strided_slice %179 {offsets = [0, 128], sizes = [8, 128], strides = [1, 1]} : vector<8x512xf32> to vector<8x128xf32>
    %187 = arith.negf %186 : vector<8x128xf32>
    %188 = math.exp %187 : vector<8x128xf32>
    %cst_35 = arith.constant 1.000000e+00 : f32
    %189 = vector.broadcast %cst_35 : f32 to vector<8x128xf32>
    %190 = arith.addf %189, %188 : vector<8x128xf32>
    %191 = arith.divf %189, %190 : vector<8x128xf32>
    %192 = vector.extract_strided_slice %179 {offsets = [0, 256], sizes = [8, 128], strides = [1, 1]} : vector<8x512xf32> to vector<8x128xf32>
    %193 = math.tanh %192 : vector<8x128xf32>
    %194 = vector.extract_strided_slice %179 {offsets = [0, 384], sizes = [8, 128], strides = [1, 1]} : vector<8x512xf32> to vector<8x128xf32>
    %195 = arith.negf %194 : vector<8x128xf32>
    %196 = math.exp %195 : vector<8x128xf32>
    %cst_36 = arith.constant 1.000000e+00 : f32
    %197 = vector.broadcast %cst_36 : f32 to vector<8x128xf32>
    %198 = arith.addf %197, %196 : vector<8x128xf32>
    %199 = arith.divf %197, %198 : vector<8x128xf32>
    %200 = arith.mulf %191, %174 : vector<8x128xf32>
    %201 = arith.mulf %185, %193 : vector<8x128xf32>
    %202 = arith.addf %200, %201 : vector<8x128xf32>
    %203 = math.tanh %202 : vector<8x128xf32>
    %204 = arith.mulf %199, %203 : vector<8x128xf32>
    %205 = vector.extract_strided_slice %6 {offsets = [56, 0], sizes = [8, 512], strides = [1, 1]} : vector<64x512xf32> to vector<8x512xf32>
    %cst_37 = arith.constant dense<0.000000e+00> : vector<8x512xf32>
    %206 = tpu.matmul %204, %0, %cst_37 {dimension_numbers = #tpu.dot_dimension_numbers<[1], [0], [0], [1], [0, 0, 1, 1], [], []>} : vector<8x128xf32>, vector<128x512xf32>, vector<8x512xf32> -> vector<8x512xf32>
    %207 = arith.addf %205, %206 : vector<8x512xf32>
    %208 = vector.extract_strided_slice %207 {offsets = [0, 0], sizes = [8, 128], strides = [1, 1]} : vector<8x512xf32> to vector<8x128xf32>
    %209 = arith.negf %208 : vector<8x128xf32>
    %210 = math.exp %209 : vector<8x128xf32>
    %cst_38 = arith.constant 1.000000e+00 : f32
    %211 = vector.broadcast %cst_38 : f32 to vector<8x128xf32>
    %212 = arith.addf %211, %210 : vector<8x128xf32>
    %213 = arith.divf %211, %212 : vector<8x128xf32>
    %214 = vector.extract_strided_slice %207 {offsets = [0, 128], sizes = [8, 128], strides = [1, 1]} : vector<8x512xf32> to vector<8x128xf32>
    %215 = arith.negf %214 : vector<8x128xf32>
    %216 = math.exp %215 : vector<8x128xf32>
    %cst_39 = arith.constant 1.000000e+00 : f32
    %217 = vector.broadcast %cst_39 : f32 to vector<8x128xf32>
    %218 = arith.addf %217, %216 : vector<8x128xf32>
    %219 = arith.divf %217, %218 : vector<8x128xf32>
    %220 = vector.extract_strided_slice %207 {offsets = [0, 256], sizes = [8, 128], strides = [1, 1]} : vector<8x512xf32> to vector<8x128xf32>
    %221 = math.tanh %220 : vector<8x128xf32>
    %222 = vector.extract_strided_slice %207 {offsets = [0, 384], sizes = [8, 128], strides = [1, 1]} : vector<8x512xf32> to vector<8x128xf32>
    %223 = arith.negf %222 : vector<8x128xf32>
    %224 = math.exp %223 : vector<8x128xf32>
    %cst_40 = arith.constant 1.000000e+00 : f32
    %225 = vector.broadcast %cst_40 : f32 to vector<8x128xf32>
    %226 = arith.addf %225, %224 : vector<8x128xf32>
    %227 = arith.divf %225, %226 : vector<8x128xf32>
    %228 = arith.mulf %219, %202 : vector<8x128xf32>
    %229 = arith.mulf %213, %221 : vector<8x128xf32>
    %230 = arith.addf %228, %229 : vector<8x128xf32>
    %231 = math.tanh %230 : vector<8x128xf32>
    %232 = arith.mulf %227, %231 : vector<8x128xf32>
    %c0_41 = arith.constant 0 : index
    %c0_42 = arith.constant 0 : index
    %233 = vector.load %arg4[%c0_41, %c0_42] : memref<128x16xf32, #tpu.memory_space<vmem>>, vector<128x16xf32>
    %cst_43 = arith.constant dense<0.000000e+00> : vector<8x16xf32>
    %234 = tpu.matmul %232, %233, %cst_43 {dimension_numbers = #tpu.dot_dimension_numbers<[1], [0], [0], [1], [0, 0, 1, 1], [], []>} : vector<8x128xf32>, vector<128x16xf32>, vector<8x16xf32> -> vector<8x16xf32>
    %c0_44 = arith.constant 0 : index
    %c0_45 = arith.constant 0 : index
    %235 = vector.load %arg5[%c0_44, %c0_45] : memref<1x16xf32, #tpu.memory_space<vmem>>, vector<1x16xf32>
    %236 = vector.broadcast %235 : vector<1x16xf32> to vector<8x16xf32>
    %237 = arith.addf %234, %236 : vector<8x16xf32>
    %c0_46 = arith.constant 0 : index
    %c0_47 = arith.constant 0 : index
    %238 = vector.load %arg6[%c0_46, %c0_47] : memref<8x16xf32, #tpu.memory_space<vmem>>, vector<8x16xf32>
    tpu.vector_store %arg6[%c0_46, %c0_47], %237 {strides = array<i32>} : memref<8x16xf32, #tpu.memory_space<vmem>>, vector<8x16xf32>,
    return
  }
}

</mosaic_0001>

<llo_original>
// kernel: tpu_custom_call.1
$region0: #{tpu_custom_call.1}
  #allocation0 [shape = 'u32[]', space=smem, size = 0x4, offset = 0x4, fixed_abs, tag = 'smem constant byte address 0x4 - core index']
  #allocation1 [shape = 'u32[72,128]{1,0:T(1,128)}', space=vmem, size = 0x9000, scoped, tag = 'internal scratch']
  %s0 = inlined_call_operand.vmem [shape: f32[64,16], index: 0, kind: input, shape index: {}]
  %s1 = inlined_call_operand.vmem [shape: f32[16,512], index: 1, kind: input, shape index: {}]
  %s2 = inlined_call_operand.hbm [shape: f32[128,512], index: 2, kind: input, shape index: {}]
  %s3 = inlined_call_operand.vmem [shape: f32[1,512], index: 3, kind: input, shape index: {}]
  %s4 = inlined_call_operand.vmem [shape: f32[128,16], index: 4, kind: input, shape index: {}]
  %s5 = inlined_call_operand.vmem [shape: f32[1,16], index: 5, kind: input, shape index: {}]
  %s6 = inlined_call_operand.hbm [shape: f32[8,16], index: 6, kind: output, shape index: {}]
  %s7 = sld [smem:[#allocation0]]
  $region38: #{tpu_custom_call.1} parent=0
    _
  %s9 = ssub.s32 1, %s7
  %s10 = scalar_select 0, %s9, %s7
  $region1: #{tpu_custom_call.1} parent=0
    #allocation2 [shape = 'u8[262144]{0}', space=vmem, size = 0x40000, scoped, tag = 'input window, operand 2, single buffered']
    #allocation3 [shape = 's32[1]{0}', space=sflag, size = 0x4, scoped, tag = 'scoped memory for tpu_custom_call.1']
    #allocation4 [shape = 's32[1]{0}', space=sflag, size = 0x4, scoped, tag = 'scoped memory for tpu_custom_call.1']
    #allocation5 [shape = 'u8[4096]{0}', space=vmem, size = 0x1000, scoped, tag = 'output window, operand 0, single buffered']
    %11 = vsyncpa [#allocation3], 0
    %12 = vsyncpa [#allocation4], 0
    // Predicated region
    $region2: #{tpu_custom_call.1} parent=1 // pred_check
      _
    $region3: #{tpu_custom_call.1} parent=1 // pred_check_branch
      %14 = sbr.rel (0) target = $region5
    $region4: #{tpu_custom_call.1} parent=1 // pred_region
      _
    $region5: #{tpu_custom_call.1} parent=1 // pred_fallthru
      _
    // Predicated region
    $region6: #{tpu_custom_call.1} parent=1 // pred_check
      _
    $region7: #{tpu_custom_call.1} parent=1 // pred_check_branch
      %16 = sbr.rel (0) target = $region9
    $region8: #{tpu_custom_call.1} parent=1 // pred_region
      _
    $region9: #{tpu_custom_call.1} parent=1 // pred_fallthru
      _
    // Predicated region
    $region10: #{tpu_custom_call.1} parent=1 // pred_check
      _
    $region11: #{tpu_custom_call.1} parent=1 // pred_check_branch
      %18 = sbr.rel (0) target = $region13
    $region12: #{tpu_custom_call.1} parent=1 // pred_region
      %20 = vsyncadd [#allocation3], 0
      %s21 = sshll.u32 %s2, 4
      %s22 = int_to_ptr.hbm [resolvable:$true] %s21
      %s23 = sshll.u32 [#allocation2], 4
      %s24 = int_to_ptr.vmem [resolvable:$true] %s23
      %29 = dma.hbm_to_vmem [thread:$0]  %s22, 8192, %s24, [#allocation3], 512, 512, 32
    $region13: #{tpu_custom_call.1} parent=1 // pred_fallthru
      _
    // Predicated region
    $region14: #{tpu_custom_call.1} parent=1 // pred_check
      _
    $region15: #{tpu_custom_call.1} parent=1 // pred_check_branch
      %31 = sbr.rel (0) target = $region17
    $region16: #{tpu_custom_call.1} parent=1 // pred_region
      _
    $region17: #{tpu_custom_call.1} parent=1 // pred_fallthru
      _
    // Predicated region
    $region18: #{tpu_custom_call.1} parent=1 // pred_check
      _
    $region19: #{tpu_custom_call.1} parent=1 // pred_check_branch
      %33 = sbr.rel (0) target = $region21
    $region20: #{tpu_custom_call.1} parent=1 // pred_region
      _
    $region21: #{tpu_custom_call.1} parent=1 // pred_fallthru
      _
    // Predicated region
    $region22: #{tpu_custom_call.1} parent=1 // pred_check
      _
    $region23: #{tpu_custom_call.1} parent=1 // pred_check_branch
      %35 = sbr.rel (0) target = $region25
    $region24: #{tpu_custom_call.1} parent=1 // pred_region
      _
    $region25: #{tpu_custom_call.1} parent=1 // pred_fallthru
      _
    // Predicated region
    $region26: #{tpu_custom_call.1} parent=1 // pred_check
      _
    $region27: #{tpu_custom_call.1} parent=1 // pred_check_branch
      %37 = sbr.rel (0) target = $region29
    $region28: #{tpu_custom_call.1} parent=1 // pred_region
      %39 = dma.done [#allocation3], 8192
    $region29: #{tpu_custom_call.1} parent=1 // pred_fallthru
      _
    %v40 = vld [vmem:[#allocation2] sm:$0xff]
    %v41 = vld [vmem:[#allocation2 + $0x8] sm:$0xff]
    %v42 = vld [vmem:[#allocation2 + $0x10] sm:$0xff]
    %v43 = vld [vmem:[#allocation2 + $0x18] sm:$0xff]
    %v44 = vld [vmem:[#allocation2 + $0x20] sm:$0xff]
    %v45 = vld [vmem:[#allocation2 + $0x28] sm:$0xff]
    %v46 = vld [vmem:[#allocation2 + $0x30] sm:$0xff]
    %v47 = vld [vmem:[#allocation2 + $0x38] sm:$0xff]
    %v48 = vld [vmem:[#allocation2 + $0x40] sm:$0xff]
    %v49 = vld [vmem:[#allocation2 + $0x48] sm:$0xff]
    %v50 = vld [vmem:[#allocation2 + $0x50] sm:$0xff]
    %v51 = vld [vmem:[#allocation2 + $0x58] sm:$0xff]
    %v52 = vld [vmem:[#allocation2 + $0x60] sm:$0xff]
    %v53 = vld [vmem:[#allocation2 + $0x68] sm:$0xff]
    %v54 = vld [vmem:[#allocation2 + $0x70] sm:$0xff]
    %v55 = vld [vmem:[#allocation2 + $0x78] sm:$0xff]
    %v56 = vld [vmem:[#allocation2 + $0x80] sm:$0xff]
    %v57 = vld [vmem:[#allocation2 + $0x88] sm:$0xff]
    %v58 = vld [vmem:[#allocation2 + $0x90] sm:$0xff]
    %v59 = vld [vmem:[#allocation2 + $0x98] sm:$0xff]
    %v60 = vld [vmem:[#allocation2 + $0xa0] sm:$0xff]
    %v61 = vld [vmem:[#allocation2 + $0xa8] sm:$0xff]
    %v62 = vld [vmem:[#allocation2 + $0xb0] sm:$0xff]
    %v63 = vld [vmem:[#allocation2 + $0xb8] sm:$0xff]
    %v64 = vld [vmem:[#allocation2 + $0xc0] sm:$0xff]
    %v65 = vld [vmem:[#allocation2 + $0xc8] sm:$0xff]
    %v66 = vld [vmem:[#allocation2 + $0xd0] sm:$0xff]
    %v67 = vld [vmem:[#allocation2 + $0xd8] sm:$0xff]
    %v68 = vld [vmem:[#allocation2 + $0xe0] sm:$0xff]
    %v69 = vld [vmem:[#allocation2 + $0xe8] sm:$0xff]
    %v70 = vld [vmem:[#allocation2 + $0xf0] sm:$0xff]
    %v71 = vld [vmem:[#allocation2 + $0xf8] sm:$0xff]
    %v72 = vld [vmem:[#allocation2 + $0x100] sm:$0xff]
    %v73 = vld [vmem:[#allocation2 + $0x108] sm:$0xff]
    %v74 = vld [vmem:[#allocation2 + $0x110] sm:$0xff]
    %v75 = vld [vmem:[#allocation2 + $0x118] sm:$0xff]
    %v76 = vld [vmem:[#allocation2 + $0x120] sm:$0xff]
    %v77 = vld [vmem:[#allocation2 + $0x128] sm:$0xff]
    %v78 = vld [vmem:[#allocation2 + $0x130] sm:$0xff]
    %v79 = vld [vmem:[#allocation2 + $0x138] sm:$0xff]
    %v80 = vld [vmem:[#allocation2 + $0x140] sm:$0xff]
    %v81 = vld [vmem:[#allocation2 + $0x148] sm:$0xff]
    %v82 = vld [vmem:[#allocation2 + $0x150] sm:$0xff]
    %v83 = vld [vmem:[#allocation2 + $0x158] sm:$0xff]
    %v84 = vld [vmem:[#allocation2 + $0x160] sm:$0xff]
    %v85 = vld [vmem:[#allocation2 + $0x168] sm:$0xff]
    %v86 = vld [vmem:[#allocation2 + $0x170] sm:$0xff]
    %v87 = vld [vmem:[#allocation2 + $0x178] sm:$0xff]
    %v88 = vld [vmem:[#allocation2 + $0x180] sm:$0xff]
    %v89 = vld [vmem:[#allocation2 + $0x188] sm:$0xff]
    %v90 = vld [vmem:[#allocation2 + $0x190] sm:$0xff]
    %v91 = vld [vmem:[#allocation2 + $0x198] sm:$0xff]
    %v92 = vld [vmem:[#allocation2 + $0x1a0] sm:$0xff]
    %v93 = vld [vmem:[#allocation2 + $0x1a8] sm:$0xff]
    %v94 = vld [vmem:[#allocation2 + $0x1b0] sm:$0xff]
    %v95 = vld [vmem:[#allocation2 + $0x1b8] sm:$0xff]
    %v96 = vld [vmem:[#allocation2 + $0x1c0] sm:$0xff]
    %v97 = vld [vmem:[#allocation2 + $0x1c8] sm:$0xff]
    %v98 = vld [vmem:[#allocation2 + $0x1d0] sm:$0xff]
    %v99 = vld [vmem:[#allocation2 + $0x1d8] sm:$0xff]
    %v100 = vld [vmem:[#allocation2 + $0x1e0] sm:$0xff]
    %v101 = vld [vmem:[#allocation2 + $0x1e8] sm:$0xff]
    %v102 = vld [vmem:[#allocation2 + $0x1f0] sm:$0xff]
    %v103 = vld [vmem:[#allocation2 + $0x1f8] sm:$0xff]
    %v104 = vld [vmem:[%s0] sm:$0xff]
    %v105 = vld [vmem:[%s0 + $0x8] sm:$0xff]
    %v106 = vld [vmem:[%s0 + $0x10] sm:$0xff]
    %v107 = vld [vmem:[%s0 + $0x18] sm:$0xff]
    %v108 = vld [vmem:[%s0 + $0x20] sm:$0xff]
    %v109 = vld [vmem:[%s0 + $0x28] sm:$0xff]
    %v110 = vld [vmem:[%s0 + $0x30] sm:$0xff]
    %v111 = vld [vmem:[%s0 + $0x38] sm:$0xff]
    %v112 = vld [vmem:[%s1] sm:$0xff]
    %v113 = vld [vmem:[%s1 + $0x8] sm:$0xff]
    %v114 = vld [vmem:[%s1 + $0x10] sm:$0xff]
    %v115 = vld [vmem:[%s1 + $0x18] sm:$0xff]
    %v116 = vld [vmem:[%s1 + $0x20] sm:$0xff]
    %v117 = vld [vmem:[%s1 + $0x28] sm:$0xff]
    %v118 = vld [vmem:[%s1 + $0x30] sm:$0xff]
    %v119 = vld [vmem:[%s1 + $0x38] sm:$0xff]
    %v120 = vld [vmem:[%s3] sm:$0xf]
    %v122 = vperm.slane %v120, 0
    %v123 = vperm.slane %v120, 1
    %v124 = vperm.slane %v120, 2
    %v125 = vperm.slane %v120, 3
    %vm130 = vcmask 130048
    %v132 = vsel %vm130, %v104, 0
    %v135 = vsel %vm130, %v105, 0
    %v138 = vsel %vm130, %v106, 0
    %v141 = vsel %vm130, %v107, 0
    %v144 = vsel %vm130, %v108, 0
    %v147 = vsel %vm130, %v109, 0
    %v150 = vsel %vm130, %v110, 0
    %v153 = vsel %vm130, %v111, 0
    %155 = vmatpush.msra.mxu0 0.0
    %156 = vmatpush.msra.mxu0 0.0
    %157 = vmatpush.msra.mxu0 0.0
    %158 = vmatpush.msra.mxu0 0.0
    %159 = vmatpush.msra.mxu0 0.0
    %160 = vmatpush.msra.mxu0 0.0
    %161 = vmatpush.msra.mxu0 0.0
    %162 = vmatpush.msra.mxu0 0.0
    %163 = vmatpush.msra.mxu0 0.0
    %164 = vmatpush.msra.mxu0 0.0
    %165 = vmatpush.msra.mxu0 0.0
    %166 = vmatpush.msra.mxu0 0.0
    %167 = vmatpush.msra.mxu0 0.0
    %168 = vmatpush.msra.mxu0 0.0
    %169 = vmatpush.msra.mxu0 %v116
    %170 = vmatpush.msra.mxu0 %v112
    %171 = vmatmul.f32.gmra.mxu0 %v132
    %v172 = vpop.f32.mrf.mxu0
    %v173 = vadd.f32 %v122, %v172
    %174 = vmatmul.f32.gmra.mxu0 %v135
    %v175 = vpop.f32.mrf.mxu0
    %v176 = vadd.f32 %v122, %v175
    %177 = vmatmul.f32.gmra.mxu0 %v138
    %v178 = vpop.f32.mrf.mxu0
    %v179 = vadd.f32 %v122, %v178
    %180 = vmatmul.f32.gmra.mxu0 %v141
    %v181 = vpop.f32.mrf.mxu0
    %v182 = vadd.f32 %v122, %v181
    %183 = vmatmul.f32.gmra.mxu0 %v144
    %v184 = vpop.f32.mrf.mxu0
    %v185 = vadd.f32 %v122, %v184
    %186 = vmatmul.f32.gmra.mxu0 %v147
    %v187 = vpop.f32.mrf.mxu0
    %v188 = vadd.f32 %v122, %v187
    %189 = vmatmul.f32.gmra.mxu0 %v150
    %v190 = vpop.f32.mrf.mxu0
    %v191 = vadd.f32 %v122, %v190
    %192 = vmatmul.f32.gmra.mxu0 %v153
    %v193 = vpop.f32.mrf.mxu0
    %v194 = vadd.f32 %v122, %v193
    %195 = vdwg.mxu0
    %196 = vmatpush.msra.mxu0 0.0
    %197 = vmatpush.msra.mxu0 0.0
    %198 = vmatpush.msra.mxu0 0.0
    %199 = vmatpush.msra.mxu0 0.0
    %200 = vmatpush.msra.mxu0 0.0
    %201 = vmatpush.msra.mxu0 0.0
    %202 = vmatpush.msra.mxu0 0.0
    %203 = vmatpush.msra.mxu0 0.0
    %204 = vmatpush.msra.mxu0 0.0
    %205 = vmatpush.msra.mxu0 0.0
    %206 = vmatpush.msra.mxu0 0.0
    %207 = vmatpush.msra.mxu0 0.0
    %208 = vmatpush.msra.mxu0 0.0
    %209 = vmatpush.msra.mxu0 0.0
    %210 = vmatpush.msra.mxu0 %v117
    %211 = vmatpush.msra.mxu0 %v113
    %212 = vmatmul.f32.gmra.mxu0 %v132
    %v213 = vpop.f32.mrf.mxu0
    %v214 = vadd.f32 %v123, %v213
    %215 = vmatmul.f32.gmra.mxu0 %v135
    %v216 = vpop.f32.mrf.mxu0
    %v217 = vadd.f32 %v123, %v216
    %218 = vmatmul.f32.gmra.mxu0 %v138
    %v219 = vpop.f32.mrf.mxu0
    %v220 = vadd.f32 %v123, %v219
    %221 = vmatmul.f32.gmra.mxu0 %v141
    %v222 = vpop.f32.mrf.mxu0
    %v223 = vadd.f32 %v123, %v222
    %224 = vmatmul.f32.gmra.mxu0 %v144
    %v225 = vpop.f32.mrf.mxu0
    %v226 = vadd.f32 %v123, %v225
    %227 = vmatmul.f32.gmra.mxu0 %v147
    %v228 = vpop.f32.mrf.mxu0
    %v229 = vadd.f32 %v123, %v228
    %230 = vmatmul.f32.gmra.mxu0 %v150
    %v231 = vpop.f32.mrf.mxu0
    %v232 = vadd.f32 %v123, %v231
    %233 = vmatmul.f32.gmra.mxu0 %v153
    %v234 = vpop.f32.mrf.mxu0
    %v235 = vadd.f32 %v123, %v234
    %236 = vdwg.mxu0
    %237 = vmatpush.msra.mxu0 0.0
    %238 = vmatpush.msra.mxu0 0.0
    %239 = vmatpush.msra.mxu0 0.0
    %240 = vmatpush.msra.mxu0 0.0
    %241 = vmatpush.msra.mxu0 0.0
    %242 = vmatpush.msra.mxu0 0.0
    %243 = vmatpush.msra.mxu0 0.0
    %244 = vmatpush.msra.mxu0 0.0
    %245 = vmatpush.msra.mxu0 0.0
    %246 = vmatpush.msra.mxu0 0.0
    %247 = vmatpush.msra.mxu0 0.0
    %248 = vmatpush.msra.mxu0 0.0
    %249 = vmatpush.msra.mxu0 0.0
    %250 = vmatpush.msra.mxu0 0.0
    %251 = vmatpush.msra.mxu0 %v118
    %252 = vmatpush.msra.mxu0 %v114
    %253 = vmatmul.f32.gmra.mxu0 %v132
    %v254 = vpop.f32.mrf.mxu0
    %v255 = vadd.f32 %v124, %v254
    %256 = vmatmul.f32.gmra.mxu0 %v135
    %v257 = vpop.f32.mrf.mxu0
    %v258 = vadd.f32 %v124, %v257
    %259 = vmatmul.f32.gmra.mxu0 %v138
    %v260 = vpop.f32.mrf.mxu0
    %v261 = vadd.f32 %v124, %v260
    %262 = vmatmul.f32.gmra.mxu0 %v141
    %v263 = vpop.f32.mrf.mxu0
    %v264 = vadd.f32 %v124, %v263
    %265 = vmatmul.f32.gmra.mxu0 %v144
    %v266 = vpop.f32.mrf.mxu0
    %v267 = vadd.f32 %v124, %v266
    %268 = vmatmul.f32.gmra.mxu0 %v147
    %v269 = vpop.f32.mrf.mxu0
    %v270 = vadd.f32 %v124, %v269
    %271 = vmatmul.f32.gmra.mxu0 %v150
    %v272 = vpop.f32.mrf.mxu0
    %v273 = vadd.f32 %v124, %v272
    %274 = vmatmul.f32.gmra.mxu0 %v153
    %v275 = vpop.f32.mrf.mxu0
    %v276 = vadd.f32 %v124, %v275
    %277 = vdwg.mxu0
    %278 = vmatpush.msra.mxu0 0.0
    %279 = vmatpush.msra.mxu0 0.0
    %280 = vmatpush.msra.mxu0 0.0
    %281 = vmatpush.msra.mxu0 0.0
    %282 = vmatpush.msra.mxu0 0.0
    %283 = vmatpush.msra.mxu0 0.0
    %284 = vmatpush.msra.mxu0 0.0
    %285 = vmatpush.msra.mxu0 0.0
    %286 = vmatpush.msra.mxu0 0.0
    %287 = vmatpush.msra.mxu0 0.0
    %288 = vmatpush.msra.mxu0 0.0
    %289 = vmatpush.msra.mxu0 0.0
    %290 = vmatpush.msra.mxu0 0.0
    %291 = vmatpush.msra.mxu0 0.0
    %292 = vmatpush.msra.mxu0 %v119
    %293 = vmatpush.msra.mxu0 %v115
    %294 = vmatmul.f32.gmra.mxu0 %v132
    %v295 = vpop.f32.mrf.mxu0
    %v296 = vadd.f32 %v125, %v295
    %297 = vmatmul.f32.gmra.mxu0 %v135
    %v298 = vpop.f32.mrf.mxu0
    %v299 = vadd.f32 %v125, %v298
    %300 = vmatmul.f32.gmra.mxu0 %v138
    %v301 = vpop.f32.mrf.mxu0
    %v302 = vadd.f32 %v125, %v301
    %303 = vmatmul.f32.gmra.mxu0 %v141
    %v304 = vpop.f32.mrf.mxu0
    %v305 = vadd.f32 %v125, %v304
    %306 = vmatmul.f32.gmra.mxu0 %v144
    %v307 = vpop.f32.mrf.mxu0
    %v308 = vadd.f32 %v125, %v307
    %309 = vmatmul.f32.gmra.mxu0 %v147
    %v310 = vpop.f32.mrf.mxu0
    %v311 = vadd.f32 %v125, %v310
    %312 = vmatmul.f32.gmra.mxu0 %v150
    %v313 = vpop.f32.mrf.mxu0
    %v314 = vadd.f32 %v125, %v313
    %315 = vmatmul.f32.gmra.mxu0 %v153
    %v316 = vpop.f32.mrf.mxu0
    %v317 = vadd.f32 %v125, %v316
    %318 = vdwg.mxu0
    %319 = vmatpush.msra.mxu0 %v100
    %320 = vmatpush.msra.mxu0 %v96
    %321 = vmatpush.msra.mxu0 %v92
    %322 = vmatpush.msra.mxu0 %v88
    %323 = vmatpush.msra.mxu0 %v84
    %324 = vmatpush.msra.mxu0 %v80
    %325 = vmatpush.msra.mxu0 %v76
    %326 = vmatpush.msra.mxu0 %v72
    %327 = vmatpush.msra.mxu0 %v68
    %328 = vmatpush.msra.mxu0 %v64
    %329 = vmatpush.msra.mxu0 %v60
    %330 = vmatpush.msra.mxu0 %v56
    %331 = vmatpush.msra.mxu0 %v52
    %332 = vmatpush.msra.mxu0 %v48
    %333 = vmatpush.msra.mxu0 %v44
    %334 = vmatpush.msra.mxu0 %v40
    %335 = vmatmul.f32.gmra.mxu0 0.0
    %v336 = vpop.f32.mrf.mxu0
    %v337 = vadd.f32 0.0, %v336
    %338 = vdwg.mxu0
    %339 = vmatpush.msra.mxu0 %v101
    %340 = vmatpush.msra.mxu0 %v97
    %341 = vmatpush.msra.mxu0 %v93
    %342 = vmatpush.msra.mxu0 %v89
    %343 = vmatpush.msra.mxu0 %v85
    %344 = vmatpush.msra.mxu0 %v81
    %345 = vmatpush.msra.mxu0 %v77
    %346 = vmatpush.msra.mxu0 %v73
    %347 = vmatpush.msra.mxu0 %v69
    %348 = vmatpush.msra.mxu0 %v65
    %349 = vmatpush.msra.mxu0 %v61
    %350 = vmatpush.msra.mxu0 %v57
    %351 = vmatpush.msra.mxu0 %v53
    %352 = vmatpush.msra.mxu0 %v49
    %353 = vmatpush.msra.mxu0 %v45
    %354 = vmatpush.msra.mxu0 %v41
    %355 = vmatmul.f32.gmra.mxu0 0.0
    %v356 = vpop.f32.mrf.mxu0
    %v357 = vadd.f32 0.0, %v356
    %358 = vdwg.mxu0
    %359 = vmatpush.msra.mxu0 %v102
    %360 = vmatpush.msra.mxu0 %v98
    %361 = vmatpush.msra.mxu0 %v94
    %362 = vmatpush.msra.mxu0 %v90
    %363 = vmatpush.msra.mxu0 %v86
    %364 = vmatpush.msra.mxu0 %v82
    %365 = vmatpush.msra.mxu0 %v78
    %366 = vmatpush.msra.mxu0 %v74
    %367 = vmatpush.msra.mxu0 %v70
    %368 = vmatpush.msra.mxu0 %v66
    %369 = vmatpush.msra.mxu0 %v62
    %370 = vmatpush.msra.mxu0 %v58
    %371 = vmatpush.msra.mxu0 %v54
    %372 = vmatpush.msra.mxu0 %v50
    %373 = vmatpush.msra.mxu0 %v46
    %374 = vmatpush.msra.mxu0 %v42
    %375 = vmatmul.f32.gmra.mxu0 0.0
    %v376 = vpop.f32.mrf.mxu0
    %v377 = vadd.f32 0.0, %v376
    %378 = vdwg.mxu0
    %379 = vmatpush.msra.mxu0 %v103
    %380 = vmatpush.msra.mxu0 %v99
    %381 = vmatpush.msra.mxu0 %v95
    %382 = vmatpush.msra.mxu0 %v91
    %383 = vmatpush.msra.mxu0 %v87
    %384 = vmatpush.msra.mxu0 %v83
    %385 = vmatpush.msra.mxu0 %v79
    %386 = vmatpush.msra.mxu0 %v75
    %387 = vmatpush.msra.mxu0 %v71
    %388 = vmatpush.msra.mxu0 %v67
    %389 = vmatpush.msra.mxu0 %v63
    %390 = vmatpush.msra.mxu0 %v59
    %391 = vmatpush.msra.mxu0 %v55
    %392 = vmatpush.msra.mxu0 %v51
    %393 = vmatpush.msra.mxu0 %v47
    %394 = vmatpush.msra.mxu0 %v43
    %395 = vmatmul.f32.gmra.mxu0 0.0
    %v396 = vpop.f32.mrf.mxu0
    %v397 = vadd.f32 0.0, %v396
    %398 = vdwg.mxu0
    %v399 = vadd.f32 %v173, %v337
    %v400 = vadd.f32 %v214, %v357
    %v401 = vadd.f32 %v255, %v377
    %v402 = vadd.f32 %v296, %v397
    %v403 = vxor.u32 %v399, 2147483648
    %v404 = vmul.f32 %v403, 1.442695
    %v405 = vpow.pop %v404
    %v406 = vadd.f32 %v405, 1.0
    %v407 = vrcp.pop %v406
    %v408 = vmul.f32 %v406, %v407
    %v409 = vsub.f32 1.0, %v408
    %v410 = vmul.f32 %v407, %v409
    %v411 = vadd.f32 %v407, %v410
    %vm412 = vweird.f32 %v406
    %vm413 = vweird.f32 %v407
    %vm414 = vmor %vm412, %vm413
    %v415 = vsel %vm414, %v407, %v411
    %v416 = vand.u32 2147483647, %v406
    %vm417 = vcmp.eq.f32.partialorder %v416, 8.507059e+37
    %v418 = vand.u32 %v406, 2147483648
    %v419 = vor.u32 1.1754944e-38, %v418
    %v420 = vsel %vm417, %v419, %v415
    %v421 = vmul.f32 1.0, %v420
    %v422 = vxor.u32 %v400, 2147483648
    %v423 = vmul.f32 %v422, 1.442695
    %v424 = vpow.pop %v423
    %v425 = vadd.f32 %v424, 1.0
    %v426 = vrcp.pop %v425
    %v427 = vmul.f32 %v425, %v426
    %v428 = vsub.f32 1.0, %v427
    %v429 = vmul.f32 %v426, %v428
    %v430 = vadd.f32 %v426, %v429
    %vm431 = vweird.f32 %v425
    %vm432 = vweird.f32 %v426
    %vm433 = vmor %vm431, %vm432
    %v434 = vsel %vm433, %v426, %v430
    %v435 = vand.u32 2147483647, %v425
    %vm436 = vcmp.eq.f32.partialorder %v435, 8.507059e+37
    %v437 = vand.u32 %v425, 2147483648
    %v438 = vor.u32 1.1754944e-38, %v437
    %v439 = vsel %vm436, %v438, %v434
    %v440 = vmul.f32 1.0, %v439
    %v441 = vtanh.pop %v401
    %v442 = vxor.u32 %v402, 2147483648
    %v443 = vmul.f32 %v442, 1.442695
    %v444 = vpow.pop %v443
    %v445 = vadd.f32 %v444, 1.0
    %v446 = vrcp.pop %v445
    %v447 = vmul.f32 %v445, %v446
    %v448 = vsub.f32 1.0, %v447
    %v449 = vmul.f32 %v446, %v448
    %v450 = vadd.f32 %v446, %v449
    %vm451 = vweird.f32 %v445
    %vm452 = vweird.f32 %v446
    %vm453 = vmor %vm451, %vm452
    %v454 = vsel %vm453, %v446, %v450
    %v455 = vand.u32 2147483647, %v445
    %vm456 = vcmp.eq.f32.partialorder %v455, 8.507059e+37
    %v457 = vand.u32 %v445, 2147483648
    %v458 = vor.u32 1.1754944e-38, %v457
    %v459 = vsel %vm456, %v458, %v454
    %v460 = vmul.f32 1.0, %v459
    %v461 = vmul.f32 %v440, 0.0
    %v462 = vmul.f32 %v421, %v441
    %v463 = vadd.f32 %v461, %v462
    %v464 = vtanh.pop %v463
    %v465 = vmul.f32 %v460, %v464
    %466 = vmatpush.msra.mxu0 %v100
    %467 = vmatpush.msra.mxu0 %v96
    %468 = vmatpush.msra.mxu0 %v92
    %469 = vmatpush.msra.mxu0 %v88
    %470 = vmatpush.msra.mxu0 %v84
    %471 = vmatpush.msra.mxu0 %v80
    %472 = vmatpush.msra.mxu0 %v76
    %473 = vmatpush.msra.mxu0 %v72
    %474 = vmatpush.msra.mxu0 %v68
    %475 = vmatpush.msra.mxu0 %v64
    %476 = vmatpush.msra.mxu0 %v60
    %477 = vmatpush.msra.mxu0 %v56
    %478 = vmatpush.msra.mxu0 %v52
    %479 = vmatpush.msra.mxu0 %v48
    %480 = vmatpush.msra.mxu0 %v44
    %481 = vmatpush.msra.mxu0 %v40
    %482 = vmatmul.f32.gmra.mxu0 %v465
    %v483 = vpop.f32.mrf.mxu0
    %v484 = vadd.f32 0.0, %v483
    %485 = vdwg.mxu0
    %486 = vmatpush.msra.mxu0 %v101
    %487 = vmatpush.msra.mxu0 %v97
    %488 = vmatpush.msra.mxu0 %v93
    %489 = vmatpush.msra.mxu0 %v89
    %490 = vmatpush.msra.mxu0 %v85
    %491 = vmatpush.msra.mxu0 %v81
    %492 = vmatpush.msra.mxu0 %v77
    %493 = vmatpush.msra.mxu0 %v73
    %494 = vmatpush.msra.mxu0 %v69
    %495 = vmatpush.msra.mxu0 %v65
    %496 = vmatpush.msra.mxu0 %v61
    %497 = vmatpush.msra.mxu0 %v57
    %498 = vmatpush.msra.mxu0 %v53
    %499 = vmatpush.msra.mxu0 %v49
    %500 = vmatpush.msra.mxu0 %v45
    %501 = vmatpush.msra.mxu0 %v41
    %502 = vmatmul.f32.gmra.mxu0 %v465
    %v503 = vpop.f32.mrf.mxu0
    %v504 = vadd.f32 0.0, %v503
    %505 = vdwg.mxu0
    %506 = vmatpush.msra.mxu0 %v102
    %507 = vmatpush.msra.mxu0 %v98
    %508 = vmatpush.msra.mxu0 %v94
    %509 = vmatpush.msra.mxu0 %v90
    %510 = vmatpush.msra.mxu0 %v86
    %511 = vmatpush.msra.mxu0 %v82
    %512 = vmatpush.msra.mxu0 %v78
    %513 = vmatpush.msra.mxu0 %v74
    %514 = vmatpush.msra.mxu0 %v70
    %515 = vmatpush.msra.mxu0 %v66
    %516 = vmatpush.msra.mxu0 %v62
    %517 = vmatpush.msra.mxu0 %v58
    %518 = vmatpush.msra.mxu0 %v54
    %519 = vmatpush.msra.mxu0 %v50
    %520 = vmatpush.msra.mxu0 %v46
    %521 = vmatpush.msra.mxu0 %v42
    %522 = vmatmul.f32.gmra.mxu0 %v465
    %v523 = vpop.f32.mrf.mxu0
    %v524 = vadd.f32 0.0, %v523
    %525 = vdwg.mxu0
    %526 = vmatpush.msra.mxu0 %v103
    %527 = vmatpush.msra.mxu0 %v99
    %528 = vmatpush.msra.mxu0 %v95
    %529 = vmatpush.msra.mxu0 %v91
    %530 = vmatpush.msra.mxu0 %v87
    %531 = vmatpush.msra.mxu0 %v83
    %532 = vmatpush.msra.mxu0 %v79
    %533 = vmatpush.msra.mxu0 %v75
    %534 = vmatpush.msra.mxu0 %v71
    %535 = vmatpush.msra.mxu0 %v67
    %536 = vmatpush.msra.mxu0 %v63
    %537 = vmatpush.msra.mxu0 %v59
    %538 = vmatpush.msra.mxu0 %v55
    %539 = vmatpush.msra.mxu0 %v51
    %540 = vmatpush.msra.mxu0 %v47
    %541 = vmatpush.msra.mxu0 %v43
    %542 = vmatmul.f32.gmra.mxu0 %v465
    %v543 = vpop.f32.mrf.mxu0
    %v544 = vadd.f32 0.0, %v543
    %545 = vdwg.mxu0
    %v546 = vadd.f32 %v176, %v484
    %v547 = vadd.f32 %v217, %v504
    %v548 = vadd.f32 %v258, %v524
    %v549 = vadd.f32 %v299, %v544
    %v550 = vxor.u32 %v546, 2147483648
    %v551 = vmul.f32 %v550, 1.442695
    %v552 = vpow.pop %v551
    %v553 = vadd.f32 %v552, 1.0
    %v554 = vrcp.pop %v553
    %v555 = vmul.f32 %v553, %v554
    %v556 = vsub.f32 1.0, %v555
    %v557 = vmul.f32 %v554, %v556
    %v558 = vadd.f32 %v554, %v557
    %vm559 = vweird.f32 %v553
    %vm560 = vweird.f32 %v554
    %vm561 = vmor %vm559, %vm560
    %v562 = vsel %vm561, %v554, %v558
    %v563 = vand.u32 2147483647, %v553
    %vm564 = vcmp.eq.f32.partialorder %v563, 8.507059e+37
    %v565 = vand.u32 %v553, 2147483648
    %v566 = vor.u32 1.1754944e-38, %v565
    %v567 = vsel %vm564, %v566, %v562
    %v568 = vmul.f32 1.0, %v567
    %v569 = vxor.u32 %v547, 2147483648
    %v570 = vmul.f32 %v569, 1.442695
    %v571 = vpow.pop %v570
    %v572 = vadd.f32 %v571, 1.0
    %v573 = vrcp.pop %v572
    %v574 = vmul.f32 %v572, %v573
    %v575 = vsub.f32 1.0, %v574
    %v576 = vmul.f32 %v573, %v575
    %v577 = vadd.f32 %v573, %v576
    %vm578 = vweird.f32 %v572
    %vm579 = vweird.f32 %v573
    %vm580 = vmor %vm578, %vm579
    %v581 = vsel %vm580, %v573, %v577
    %v582 = vand.u32 2147483647, %v572
    %vm583 = vcmp.eq.f32.partialorder %v582, 8.507059e+37
    %v584 = vand.u32 %v572, 2147483648
    %v585 = vor.u32 1.1754944e-38, %v584
    %v586 = vsel %vm583, %v585, %v581
    %v587 = vmul.f32 1.0, %v586
    %v588 = vtanh.pop %v548
    %v589 = vxor.u32 %v549, 2147483648
    %v590 = vmul.f32 %v589, 1.442695
    %v591 = vpow.pop %v590
    %v592 = vadd.f32 %v591, 1.0
    %v593 = vrcp.pop %v592
    %v594 = vmul.f32 %v592, %v593
    %v595 = vsub.f32 1.0, %v594
    %v596 = vmul.f32 %v593, %v595
    %v597 = vadd.f32 %v593, %v596
    %vm598 = vweird.f32 %v592
    %vm599 = vweird.f32 %v593
    %vm600 = vmor %vm598, %vm599
    %v601 = vsel %vm600, %v593, %v597
    %v602 = vand.u32 2147483647, %v592
    %vm603 = vcmp.eq.f32.partialorder %v602, 8.507059e+37
    %v604 = vand.u32 %v592, 2147483648
    %v605 = vor.u32 1.1754944e-38, %v604
    %v606 = vsel %vm603, %v605, %v601
    %v607 = vmul.f32 1.0, %v606
    %v608 = vmul.f32 %v587, %v463
    %v609 = vmul.f32 %v568, %v588
    %v610 = vadd.f32 %v608, %v609
    %v611 = vtanh.pop %v610
    %v612 = vmul.f32 %v607, %v611
    %613 = vmatpush.msra.mxu0 %v100
    %614 = vmatpush.msra.mxu0 %v96
    %615 = vmatpush.msra.mxu0 %v92
    %616 = vmatpush.msra.mxu0 %v88
    %617 = vmatpush.msra.mxu0 %v84
    %618 = vmatpush.msra.mxu0 %v80
    %619 = vmatpush.msra.mxu0 %v76
    %620 = vmatpush.msra.mxu0 %v72
    %621 = vmatpush.msra.mxu0 %v68
    %622 = vmatpush.msra.mxu0 %v64
    %623 = vmatpush.msra.mxu0 %v60
    %624 = vmatpush.msra.mxu0 %v56
    %625 = vmatpush.msra.mxu0 %v52
    %626 = vmatpush.msra.mxu0 %v48
    %627 = vmatpush.msra.mxu0 %v44
    %628 = vmatpush.msra.mxu0 %v40
    %629 = vmatmul.f32.gmra.mxu0 %v612
    %v630 = vpop.f32.mrf.mxu0
    %v631 = vadd.f32 0.0, %v630
    %632 = vdwg.mxu0
    %633 = vmatpush.msra.mxu0 %v101
    %634 = vmatpush.msra.mxu0 %v97
    %635 = vmatpush.msra.mxu0 %v93
    %636 = vmatpush.msra.mxu0 %v89
    %637 = vmatpush.msra.mxu0 %v85
    %638 = vmatpush.msra.mxu0 %v81
    %639 = vmatpush.msra.mxu0 %v77
    %640 = vmatpush.msra.mxu0 %v73
    %641 = vmatpush.msra.mxu0 %v69
    %642 = vmatpush.msra.mxu0 %v65
    %643 = vmatpush.msra.mxu0 %v61
    %644 = vmatpush.msra.mxu0 %v57
    %645 = vmatpush.msra.mxu0 %v53
    %646 = vmatpush.msra.mxu0 %v49
    %647 = vmatpush.msra.mxu0 %v45
    %648 = vmatpush.msra.mxu0 %v41
    %649 = vmatmul.f32.gmra.mxu0 %v612
    %v650 = vpop.f32.mrf.mxu0
    %v651 = vadd.f32 0.0, %v650
    %652 = vdwg.mxu0
    %653 = vmatpush.msra.mxu0 %v102
    %654 = vmatpush.msra.mxu0 %v98
    %655 = vmatpush.msra.mxu0 %v94
    %656 = vmatpush.msra.mxu0 %v90
    %657 = vmatpush.msra.mxu0 %v86
    %658 = vmatpush.msra.mxu0 %v82
    %659 = vmatpush.msra.mxu0 %v78
    %660 = vmatpush.msra.mxu0 %v74
    %661 = vmatpush.msra.mxu0 %v70
    %662 = vmatpush.msra.mxu0 %v66
    %663 = vmatpush.msra.mxu0 %v62
    %664 = vmatpush.msra.mxu0 %v58
    %665 = vmatpush.msra.mxu0 %v54
    %666 = vmatpush.msra.mxu0 %v50
    %667 = vmatpush.msra.mxu0 %v46
    %668 = vmatpush.msra.mxu0 %v42
    %669 = vmatmul.f32.gmra.mxu0 %v612
    %v670 = vpop.f32.mrf.mxu0
    %v671 = vadd.f32 0.0, %v670
    %672 = vdwg.mxu0
    %673 = vmatpush.msra.mxu0 %v103
    %674 = vmatpush.msra.mxu0 %v99
    %675 = vmatpush.msra.mxu0 %v95
    %676 = vmatpush.msra.mxu0 %v91
    %677 = vmatpush.msra.mxu0 %v87
    %678 = vmatpush.msra.mxu0 %v83
    %679 = vmatpush.msra.mxu0 %v79
    %680 = vmatpush.msra.mxu0 %v75
    %681 = vmatpush.msra.mxu0 %v71
    %682 = vmatpush.msra.mxu0 %v67
    %683 = vmatpush.msra.mxu0 %v63
    %684 = vmatpush.msra.mxu0 %v59
    %685 = vmatpush.msra.mxu0 %v55
    %686 = vmatpush.msra.mxu0 %v51
    %687 = vmatpush.msra.mxu0 %v47
    %688 = vmatpush.msra.mxu0 %v43
    %689 = vmatmul.f32.gmra.mxu0 %v612
    %v690 = vpop.f32.mrf.mxu0
    %v691 = vadd.f32 0.0, %v690
    %692 = vdwg.mxu0
    %v693 = vadd.f32 %v179, %v631
    %v694 = vadd.f32 %v220, %v651
    %v695 = vadd.f32 %v261, %v671
    %v696 = vadd.f32 %v302, %v691
    %v697 = vxor.u32 %v693, 2147483648
    %v698 = vmul.f32 %v697, 1.442695
    %v699 = vpow.pop %v698
    %v700 = vadd.f32 %v699, 1.0
    %v701 = vrcp.pop %v700
    %v702 = vmul.f32 %v700, %v701
    %v703 = vsub.f32 1.0, %v702
    %v704 = vmul.f32 %v701, %v703
    %v705 = vadd.f32 %v701, %v704
    %vm706 = vweird.f32 %v700
    %vm707 = vweird.f32 %v701
    %vm708 = vmor %vm706, %vm707
    %v709 = vsel %vm708, %v701, %v705
    %v710 = vand.u32 2147483647, %v700
    %vm711 = vcmp.eq.f32.partialorder %v710, 8.507059e+37
    %v712 = vand.u32 %v700, 2147483648
    %v713 = vor.u32 1.1754944e-38, %v712
    %v714 = vsel %vm711, %v713, %v709
    %v715 = vmul.f32 1.0, %v714
    %v716 = vxor.u32 %v694, 2147483648
    %v717 = vmul.f32 %v716, 1.442695
    %v718 = vpow.pop %v717
    %v719 = vadd.f32 %v718, 1.0
    %v720 = vrcp.pop %v719
    %v721 = vmul.f32 %v719, %v720
    %v722 = vsub.f32 1.0, %v721
    %v723 = vmul.f32 %v720, %v722
    %v724 = vadd.f32 %v720, %v723
    %vm725 = vweird.f32 %v719
    %vm726 = vweird.f32 %v720
    %vm727 = vmor %vm725, %vm726
    %v728 = vsel %vm727, %v720, %v724
    %v729 = vand.u32 2147483647, %v719
    %vm730 = vcmp.eq.f32.partialorder %v729, 8.507059e+37
    %v731 = vand.u32 %v719, 2147483648
    %v732 = vor.u32 1.1754944e-38, %v731
    %v733 = vsel %vm730, %v732, %v728
    %v734 = vmul.f32 1.0, %v733
    %v735 = vtanh.pop %v695
    %v736 = vxor.u32 %v696, 2147483648
    %v737 = vmul.f32 %v736, 1.442695
    %v738 = vpow.pop %v737
    %v739 = vadd.f32 %v738, 1.0
    %v740 = vrcp.pop %v739
    %v741 = vmul.f32 %v739, %v740
    %v742 = vsub.f32 1.0, %v741
    %v743 = vmul.f32 %v740, %v742
    %v744 = vadd.f32 %v740, %v743
    %vm745 = vweird.f32 %v739
    %vm746 = vweird.f32 %v740
    %vm747 = vmor %vm745, %vm746
    %v748 = vsel %vm747, %v740, %v744
    %v749 = vand.u32 2147483647, %v739
    %vm750 = vcmp.eq.f32.partialorder %v749, 8.507059e+37
    %v751 = vand.u32 %v739, 2147483648
    %v752 = vor.u32 1.1754944e-38, %v751
    %v753 = vsel %vm750, %v752, %v748
    %v754 = vmul.f32 1.0, %v753
    %v755 = vmul.f32 %v734, %v610
    %v756 = vmul.f32 %v715, %v735
    %v757 = vadd.f32 %v755, %v756
    %v758 = vtanh.pop %v757
    %v759 = vmul.f32 %v754, %v758
    %760 = vmatpush.msra.mxu0 %v100
    %761 = vmatpush.msra.mxu0 %v96
    %762 = vmatpush.msra.mxu0 %v92
    %763 = vmatpush.msra.mxu0 %v88
    %764 = vmatpush.msra.mxu0 %v84
    %765 = vmatpush.msra.mxu0 %v80
    %766 = vmatpush.msra.mxu0 %v76
    %767 = vmatpush.msra.mxu0 %v72
    %768 = vmatpush.msra.mxu0 %v68
    %769 = vmatpush.msra.mxu0 %v64
    %770 = vmatpush.msra.mxu0 %v60
    %771 = vmatpush.msra.mxu0 %v56
    %772 = vmatpush.msra.mxu0 %v52
    %773 = vmatpush.msra.mxu0 %v48
    %774 = vmatpush.msra.mxu0 %v44
    %775 = vmatpush.msra.mxu0 %v40
    %776 = vmatmul.f32.gmra.mxu0 %v759
    %v777 = vpop.f32.mrf.mxu0
    %v778 = vadd.f32 0.0, %v777
    %779 = vdwg.mxu0
    %780 = vmatpush.msra.mxu0 %v101
    %781 = vmatpush.msra.mxu0 %v97
    %782 = vmatpush.msra.mxu0 %v93
    %783 = vmatpush.msra.mxu0 %v89
    %784 = vmatpush.msra.mxu0 %v85
    %785 = vmatpush.msra.mxu0 %v81
    %786 = vmatpush.msra.mxu0 %v77
    %787 = vmatpush.msra.mxu0 %v73
    %788 = vmatpush.msra.mxu0 %v69
    %789 = vmatpush.msra.mxu0 %v65
    %790 = vmatpush.msra.mxu0 %v61
    %791 = vmatpush.msra.mxu0 %v57
    %792 = vmatpush.msra.mxu0 %v53
    %793 = vmatpush.msra.mxu0 %v49
    %794 = vmatpush.msra.mxu0 %v45
    %795 = vmatpush.msra.mxu0 %v41
    %796 = vmatmul.f32.gmra.mxu0 %v759
    %v797 = vpop.f32.mrf.mxu0
    %v798 = vadd.f32 0.0, %v797
    %799 = vdwg.mxu0
    %800 = vmatpush.msra.mxu0 %v102
    %801 = vmatpush.msra.mxu0 %v98
    %802 = vmatpush.msra.mxu0 %v94
    %803 = vmatpush.msra.mxu0 %v90
    %804 = vmatpush.msra.mxu0 %v86
    %805 = vmatpush.msra.mxu0 %v82
    %806 = vmatpush.msra.mxu0 %v78
    %807 = vmatpush.msra.mxu0 %v74
    %808 = vmatpush.msra.mxu0 %v70
    %809 = vmatpush.msra.mxu0 %v66
    %810 = vmatpush.msra.mxu0 %v62
    %811 = vmatpush.msra.mxu0 %v58
    %812 = vmatpush.msra.mxu0 %v54
    %813 = vmatpush.msra.mxu0 %v50
    %814 = vmatpush.msra.mxu0 %v46
    %815 = vmatpush.msra.mxu0 %v42
    %816 = vmatmul.f32.gmra.mxu0 %v759
    %v817 = vpop.f32.mrf.mxu0
    %v818 = vadd.f32 0.0, %v817
    %819 = vdwg.mxu0
    %820 = vmatpush.msra.mxu0 %v103
    %821 = vmatpush.msra.mxu0 %v99
    %822 = vmatpush.msra.mxu0 %v95
    %823 = vmatpush.msra.mxu0 %v91
    %824 = vmatpush.msra.mxu0 %v87
    %825 = vmatpush.msra.mxu0 %v83
    %826 = vmatpush.msra.mxu0 %v79
    %827 = vmatpush.msra.mxu0 %v75
    %828 = vmatpush.msra.mxu0 %v71
    %829 = vmatpush.msra.mxu0 %v67
    %830 = vmatpush.msra.mxu0 %v63
    %831 = vmatpush.msra.mxu0 %v59
    %832 = vmatpush.msra.mxu0 %v55
    %833 = vmatpush.msra.mxu0 %v51
    %834 = vmatpush.msra.mxu0 %v47
    %835 = vmatpush.msra.mxu0 %v43
    %836 = vmatmul.f32.gmra.mxu0 %v759
    %v837 = vpop.f32.mrf.mxu0
    %v838 = vadd.f32 0.0, %v837
    %839 = vdwg.mxu0
    %v840 = vadd.f32 %v182, %v778
    %v841 = vadd.f32 %v223, %v798
    %v842 = vadd.f32 %v264, %v818
    %v843 = vadd.f32 %v305, %v838
    %v844 = vxor.u32 %v840, 2147483648
    %v845 = vmul.f32 %v844, 1.442695
    %v846 = vpow.pop %v845
    %v847 = vadd.f32 %v846, 1.0
    %v848 = vrcp.pop %v847
    %v849 = vmul.f32 %v847, %v848
    %v850 = vsub.f32 1.0, %v849
    %v851 = vmul.f32 %v848, %v850
    %v852 = vadd.f32 %v848, %v851
    %vm853 = vweird.f32 %v847
    %vm854 = vweird.f32 %v848
    %vm855 = vmor %vm853, %vm854
    %v856 = vsel %vm855, %v848, %v852
    %v857 = vand.u32 2147483647, %v847
    %vm858 = vcmp.eq.f32.partialorder %v857, 8.507059e+37
    %v859 = vand.u32 %v847, 2147483648
    %v860 = vor.u32 1.1754944e-38, %v859
    %v861 = vsel %vm858, %v860, %v856
    %v862 = vmul.f32 1.0, %v861
    %v863 = vxor.u32 %v841, 2147483648
    %v864 = vmul.f32 %v863, 1.442695
    %v865 = vpow.pop %v864
    %v866 = vadd.f32 %v865, 1.0
    %v867 = vrcp.pop %v866
    %v868 = vmul.f32 %v866, %v867
    %v869 = vsub.f32 1.0, %v868
    %v870 = vmul.f32 %v867, %v869
    %v871 = vadd.f32 %v867, %v870
    %vm872 = vweird.f32 %v866
    %vm873 = vweird.f32 %v867
    %vm874 = vmor %vm872, %vm873
    %v875 = vsel %vm874, %v867, %v871
    %v876 = vand.u32 2147483647, %v866
    %vm877 = vcmp.eq.f32.partialorder %v876, 8.507059e+37
    %v878 = vand.u32 %v866, 2147483648
    %v879 = vor.u32 1.1754944e-38, %v878
    %v880 = vsel %vm877, %v879, %v875
    %v881 = vmul.f32 1.0, %v880
    %v882 = vtanh.pop %v842
    %v883 = vxor.u32 %v843, 2147483648
    %v884 = vmul.f32 %v883, 1.442695
    %v885 = vpow.pop %v884
    %v886 = vadd.f32 %v885, 1.0
    %v887 = vrcp.pop %v886
    %v888 = vmul.f32 %v886, %v887
    %v889 = vsub.f32 1.0, %v888
    %v890 = vmul.f32 %v887, %v889
    %v891 = vadd.f32 %v887, %v890
    %vm892 = vweird.f32 %v886
    %vm893 = vweird.f32 %v887
    %vm894 = vmor %vm892, %vm893
    %v895 = vsel %vm894, %v887, %v891
    %v896 = vand.u32 2147483647, %v886
    %vm897 = vcmp.eq.f32.partialorder %v896, 8.507059e+37
    %v898 = vand.u32 %v886, 2147483648
    %v899 = vor.u32 1.1754944e-38, %v898
    %v900 = vsel %vm897, %v899, %v895
    %v901 = vmul.f32 1.0, %v900
    %v902 = vmul.f32 %v881, %v757
    %v903 = vmul.f32 %v862, %v882
    %v904 = vadd.f32 %v902, %v903
    %v905 = vtanh.pop %v904
    %v906 = vmul.f32 %v901, %v905
    %907 = vmatpush.msra.mxu0 %v100
    %908 = vmatpush.msra.mxu0 %v96
    %909 = vmatpush.msra.mxu0 %v92
    %910 = vmatpush.msra.mxu0 %v88
    %911 = vmatpush.msra.mxu0 %v84
    %912 = vmatpush.msra.mxu0 %v80
    %913 = vmatpush.msra.mxu0 %v76
    %914 = vmatpush.msra.mxu0 %v72
    %915 = vmatpush.msra.mxu0 %v68
    %916 = vmatpush.msra.mxu0 %v64
    %917 = vmatpush.msra.mxu0 %v60
    %918 = vmatpush.msra.mxu0 %v56
    %919 = vmatpush.msra.mxu0 %v52
    %920 = vmatpush.msra.mxu0 %v48
    %921 = vmatpush.msra.mxu0 %v44
    %922 = vmatpush.msra.mxu0 %v40
    %923 = vmatmul.f32.gmra.mxu0 %v906
    %v924 = vpop.f32.mrf.mxu0
    %v925 = vadd.f32 0.0, %v924
    %926 = vdwg.mxu0
    %927 = vmatpush.msra.mxu0 %v101
    %928 = vmatpush.msra.mxu0 %v97
    %929 = vmatpush.msra.mxu0 %v93
    %930 = vmatpush.msra.mxu0 %v89
    %931 = vmatpush.msra.mxu0 %v85
    %932 = vmatpush.msra.mxu0 %v81
    %933 = vmatpush.msra.mxu0 %v77
    %934 = vmatpush.msra.mxu0 %v73
    %935 = vmatpush.msra.mxu0 %v69
    %936 = vmatpush.msra.mxu0 %v65
    %937 = vmatpush.msra.mxu0 %v61
    %938 = vmatpush.msra.mxu0 %v57
    %939 = vmatpush.msra.mxu0 %v53
    %940 = vmatpush.msra.mxu0 %v49
    %941 = vmatpush.msra.mxu0 %v45
    %942 = vmatpush.msra.mxu0 %v41
    %943 = vmatmul.f32.gmra.mxu0 %v906
    %v944 = vpop.f32.mrf.mxu0
    %v945 = vadd.f32 0.0, %v944
    %946 = vdwg.mxu0
    %947 = vmatpush.msra.mxu0 %v102
    %948 = vmatpush.msra.mxu0 %v98
    %949 = vmatpush.msra.mxu0 %v94
    %950 = vmatpush.msra.mxu0 %v90
    %951 = vmatpush.msra.mxu0 %v86
    %952 = vmatpush.msra.mxu0 %v82
    %953 = vmatpush.msra.mxu0 %v78
    %954 = vmatpush.msra.mxu0 %v74
    %955 = vmatpush.msra.mxu0 %v70
    %956 = vmatpush.msra.mxu0 %v66
    %957 = vmatpush.msra.mxu0 %v62
    %958 = vmatpush.msra.mxu0 %v58
    %959 = vmatpush.msra.mxu0 %v54
    %960 = vmatpush.msra.mxu0 %v50
    %961 = vmatpush.msra.mxu0 %v46
    %962 = vmatpush.msra.mxu0 %v42
    %963 = vmatmul.f32.gmra.mxu0 %v906
    %v964 = vpop.f32.mrf.mxu0
    %v965 = vadd.f32 0.0, %v964
    %966 = vdwg.mxu0
    %967 = vmatpush.msra.mxu0 %v103
    %968 = vmatpush.msra.mxu0 %v99
    %969 = vmatpush.msra.mxu0 %v95
    %970 = vmatpush.msra.mxu0 %v91
    %971 = vmatpush.msra.mxu0 %v87
    %972 = vmatpush.msra.mxu0 %v83
    %973 = vmatpush.msra.mxu0 %v79
    %974 = vmatpush.msra.mxu0 %v75
    %975 = vmatpush.msra.mxu0 %v71
    %976 = vmatpush.msra.mxu0 %v67
    %977 = vmatpush.msra.mxu0 %v63
    %978 = vmatpush.msra.mxu0 %v59
    %979 = vmatpush.msra.mxu0 %v55
    %980 = vmatpush.msra.mxu0 %v51
    %981 = vmatpush.msra.mxu0 %v47
    %982 = vmatpush.msra.mxu0 %v43
    %983 = vmatmul.f32.gmra.mxu0 %v906
    %v984 = vpop.f32.mrf.mxu0
    %v985 = vadd.f32 0.0, %v984
    %986 = vdwg.mxu0
    %v987 = vadd.f32 %v185, %v925
    %v988 = vadd.f32 %v226, %v945
    %v989 = vadd.f32 %v267, %v965
    %v990 = vadd.f32 %v308, %v985
    %v991 = vxor.u32 %v987, 2147483648
    %v992 = vmul.f32 %v991, 1.442695
    %v993 = vpow.pop %v992
    %v994 = vadd.f32 %v993, 1.0
    %v995 = vrcp.pop %v994
    %v996 = vmul.f32 %v994, %v995
    %v997 = vsub.f32 1.0, %v996
    %v998 = vmul.f32 %v995, %v997
    %v999 = vadd.f32 %v995, %v998
    %vm1000 = vweird.f32 %v994
    %vm1001 = vweird.f32 %v995
    %vm1002 = vmor %vm1000, %vm1001
    %v1003 = vsel %vm1002, %v995, %v999
    %v1004 = vand.u32 2147483647, %v994
    %vm1005 = vcmp.eq.f32.partialorder %v1004, 8.507059e+37
    %v1006 = vand.u32 %v994, 2147483648
    %v1007 = vor.u32 1.1754944e-38, %v1006
    %v1008 = vsel %vm1005, %v1007, %v1003
    %v1009 = vmul.f32 1.0, %v1008
    %v1010 = vxor.u32 %v988, 2147483648
    %v1011 = vmul.f32 %v1010, 1.442695
    %v1012 = vpow.pop %v1011
    %v1013 = vadd.f32 %v1012, 1.0
    %v1014 = vrcp.pop %v1013
    %v1015 = vmul.f32 %v1013, %v1014
    %v1016 = vsub.f32 1.0, %v1015
    %v1017 = vmul.f32 %v1014, %v1016
    %v1018 = vadd.f32 %v1014, %v1017
    %vm1019 = vweird.f32 %v1013
    %vm1020 = vweird.f32 %v1014
    %vm1021 = vmor %vm1019, %vm1020
    %v1022 = vsel %vm1021, %v1014, %v1018
    %v1023 = vand.u32 2147483647, %v1013
    %vm1024 = vcmp.eq.f32.partialorder %v1023, 8.507059e+37
    %v1025 = vand.u32 %v1013, 2147483648
    %v1026 = vor.u32 1.1754944e-38, %v1025
    %v1027 = vsel %vm1024, %v1026, %v1022
    %v1028 = vmul.f32 1.0, %v1027
    %v1029 = vtanh.pop %v989
    %v1030 = vxor.u32 %v990, 2147483648
    %v1031 = vmul.f32 %v1030, 1.442695
    %v1032 = vpow.pop %v1031
    %v1033 = vadd.f32 %v1032, 1.0
    %v1034 = vrcp.pop %v1033
    %v1035 = vmul.f32 %v1033, %v1034
    %v1036 = vsub.f32 1.0, %v1035
    %v1037 = vmul.f32 %v1034, %v1036
    %v1038 = vadd.f32 %v1034, %v1037
    %vm1039 = vweird.f32 %v1033
    %vm1040 = vweird.f32 %v1034
    %vm1041 = vmor %vm1039, %vm1040
    %v1042 = vsel %vm1041, %v1034, %v1038
    %v1043 = vand.u32 2147483647, %v1033
    %vm1044 = vcmp.eq.f32.partialorder %v1043, 8.507059e+37
    %v1045 = vand.u32 %v1033, 2147483648
    %v1046 = vor.u32 1.1754944e-38, %v1045
    %v1047 = vsel %vm1044, %v1046, %v1042
    %v1048 = vmul.f32 1.0, %v1047
    %v1049 = vmul.f32 %v1028, %v904
    %v1050 = vmul.f32 %v1009, %v1029
    %v1051 = vadd.f32 %v1049, %v1050
    %v1052 = vtanh.pop %v1051
    %v1053 = vmul.f32 %v1048, %v1052
    %1054 = vmatpush.msra.mxu0 %v100
    %1055 = vmatpush.msra.mxu0 %v96
    %1056 = vmatpush.msra.mxu0 %v92
    %1057 = vmatpush.msra.mxu0 %v88
    %1058 = vmatpush.msra.mxu0 %v84
    %1059 = vmatpush.msra.mxu0 %v80
    %1060 = vmatpush.msra.mxu0 %v76
    %1061 = vmatpush.msra.mxu0 %v72
    %1062 = vmatpush.msra.mxu0 %v68
    %1063 = vmatpush.msra.mxu0 %v64
    %1064 = vmatpush.msra.mxu0 %v60
    %1065 = vmatpush.msra.mxu0 %v56
    %1066 = vmatpush.msra.mxu0 %v52
    %1067 = vmatpush.msra.mxu0 %v48
    %1068 = vmatpush.msra.mxu0 %v44
    %1069 = vmatpush.msra.mxu0 %v40
    %1070 = vmatmul.f32.gmra.mxu0 %v1053
    %v1071 = vpop.f32.mrf.mxu0
    %v1072 = vadd.f32 0.0, %v1071
    %1073 = vdwg.mxu0
    %1074 = vmatpush.msra.mxu0 %v101
    %1075 = vmatpush.msra.mxu0 %v97
    %1076 = vmatpush.msra.mxu0 %v93
    %1077 = vmatpush.msra.mxu0 %v89
    %1078 = vmatpush.msra.mxu0 %v85
    %1079 = vmatpush.msra.mxu0 %v81
    %1080 = vmatpush.msra.mxu0 %v77
    %1081 = vmatpush.msra.mxu0 %v73
    %1082 = vmatpush.msra.mxu0 %v69
    %1083 = vmatpush.msra.mxu0 %v65
    %1084 = vmatpush.msra.mxu0 %v61
    %1085 = vmatpush.msra.mxu0 %v57
    %1086 = vmatpush.msra.mxu0 %v53
    %1087 = vmatpush.msra.mxu0 %v49
    %1088 = vmatpush.msra.mxu0 %v45
    %1089 = vmatpush.msra.mxu0 %v41
    %1090 = vmatmul.f32.gmra.mxu0 %v1053
    %v1091 = vpop.f32.mrf.mxu0
    %v1092 = vadd.f32 0.0, %v1091
    %1093 = vdwg.mxu0
    %1094 = vmatpush.msra.mxu0 %v102
    %1095 = vmatpush.msra.mxu0 %v98
    %1096 = vmatpush.msra.mxu0 %v94
    %1097 = vmatpush.msra.mxu0 %v90
    %1098 = vmatpush.msra.mxu0 %v86
    %1099 = vmatpush.msra.mxu0 %v82
    %1100 = vmatpush.msra.mxu0 %v78
    %1101 = vmatpush.msra.mxu0 %v74
    %1102 = vmatpush.msra.mxu0 %v70
    %1103 = vmatpush.msra.mxu0 %v66
    %1104 = vmatpush.msra.mxu0 %v62
    %1105 = vmatpush.msra.mxu0 %v58
    %1106 = vmatpush.msra.mxu0 %v54
    %1107 = vmatpush.msra.mxu0 %v50
    %1108 = vmatpush.msra.mxu0 %v46
    %1109 = vmatpush.msra.mxu0 %v42
    %1110 = vmatmul.f32.gmra.mxu0 %v1053
    %v1111 = vpop.f32.mrf.mxu0
    %v1112 = vadd.f32 0.0, %v1111
    %1113 = vdwg.mxu0
    %1114 = vmatpush.msra.mxu0 %v103
    %1115 = vmatpush.msra.mxu0 %v99
    %1116 = vmatpush.msra.mxu0 %v95
    %1117 = vmatpush.msra.mxu0 %v91
    %1118 = vmatpush.msra.mxu0 %v87
    %1119 = vmatpush.msra.mxu0 %v83
    %1120 = vmatpush.msra.mxu0 %v79
    %1121 = vmatpush.msra.mxu0 %v75
    %1122 = vmatpush.msra.mxu0 %v71
    %1123 = vmatpush.msra.mxu0 %v67
    %1124 = vmatpush.msra.mxu0 %v63
    %1125 = vmatpush.msra.mxu0 %v59
    %1126 = vmatpush.msra.mxu0 %v55
    %1127 = vmatpush.msra.mxu0 %v51
    %1128 = vmatpush.msra.mxu0 %v47
    %1129 = vmatpush.msra.mxu0 %v43
    %1130 = vmatmul.f32.gmra.mxu0 %v1053
    %v1131 = vpop.f32.mrf.mxu0
    %v1132 = vadd.f32 0.0, %v1131
    %1133 = vdwg.mxu0
    %v1134 = vadd.f32 %v188, %v1072
    %v1135 = vadd.f32 %v229, %v1092
    %v1136 = vadd.f32 %v270, %v1112
    %v1137 = vadd.f32 %v311, %v1132
    %v1138 = vxor.u32 %v1134, 2147483648
    %v1139 = vmul.f32 %v1138, 1.442695
    %v1140 = vpow.pop %v1139
    %v1141 = vadd.f32 %v1140, 1.0
    %v1142 = vrcp.pop %v1141
    %v1143 = vmul.f32 %v1141, %v1142
    %v1144 = vsub.f32 1.0, %v1143
    %v1145 = vmul.f32 %v1142, %v1144
    %v1146 = vadd.f32 %v1142, %v1145
    %vm1147 = vweird.f32 %v1141
    %vm1148 = vweird.f32 %v1142
    %vm1149 = vmor %vm1147, %vm1148
    %v1150 = vsel %vm1149, %v1142, %v1146
    %v1151 = vand.u32 2147483647, %v1141
    %vm1152 = vcmp.eq.f32.partialorder %v1151, 8.507059e+37
    %v1153 = vand.u32 %v1141, 2147483648
    %v1154 = vor.u32 1.1754944e-38, %v1153
    %v1155 = vsel %vm1152, %v1154, %v1150
    %v1156 = vmul.f32 1.0, %v1155
    %v1157 = vxor.u32 %v1135, 2147483648
    %v1158 = vmul.f32 %v1157, 1.442695
    %v1159 = vpow.pop %v1158
    %v1160 = vadd.f32 %v1159, 1.0
    %v1161 = vrcp.pop %v1160
    %v1162 = vmul.f32 %v1160, %v1161
    %v1163 = vsub.f32 1.0, %v1162
    %v1164 = vmul.f32 %v1161, %v1163
    %v1165 = vadd.f32 %v1161, %v1164
    %vm1166 = vweird.f32 %v1160
    %vm1167 = vweird.f32 %v1161
    %vm1168 = vmor %vm1166, %vm1167
    %v1169 = vsel %vm1168, %v1161, %v1165
    %v1170 = vand.u32 2147483647, %v1160
    %vm1171 = vcmp.eq.f32.partialorder %v1170, 8.507059e+37
    %v1172 = vand.u32 %v1160, 2147483648
    %v1173 = vor.u32 1.1754944e-38, %v1172
    %v1174 = vsel %vm1171, %v1173, %v1169
    %v1175 = vmul.f32 1.0, %v1174
    %v1176 = vtanh.pop %v1136
    %v1177 = vxor.u32 %v1137, 2147483648
    %v1178 = vmul.f32 %v1177, 1.442695
    %v1179 = vpow.pop %v1178
    %v1180 = vadd.f32 %v1179, 1.0
    %v1181 = vrcp.pop %v1180
    %v1182 = vmul.f32 %v1180, %v1181
    %v1183 = vsub.f32 1.0, %v1182
    %v1184 = vmul.f32 %v1181, %v1183
    %v1185 = vadd.f32 %v1181, %v1184
    %vm1186 = vweird.f32 %v1180
    %vm1187 = vweird.f32 %v1181
    %vm1188 = vmor %vm1186, %vm1187
    %v1189 = vsel %vm1188, %v1181, %v1185
    %v1190 = vand.u32 2147483647, %v1180
    %vm1191 = vcmp.eq.f32.partialorder %v1190, 8.507059e+37
    %v1192 = vand.u32 %v1180, 2147483648
    %v1193 = vor.u32 1.1754944e-38, %v1192
    %v1194 = vsel %vm1191, %v1193, %v1189
    %v1195 = vmul.f32 1.0, %v1194
    %v1196 = vmul.f32 %v1175, %v1051
    %v1197 = vmul.f32 %v1156, %v1176
    %v1198 = vadd.f32 %v1196, %v1197
    %v1199 = vtanh.pop %v1198
    %v1200 = vmul.f32 %v1195, %v1199
    %1201 = vmatpush.msra.mxu0 %v100
    %1202 = vmatpush.msra.mxu0 %v96
    %1203 = vmatpush.msra.mxu0 %v92
    %1204 = vmatpush.msra.mxu0 %v88
    %1205 = vmatpush.msra.mxu0 %v84
    %1206 = vmatpush.msra.mxu0 %v80
    %1207 = vmatpush.msra.mxu0 %v76
    %1208 = vmatpush.msra.mxu0 %v72
    %1209 = vmatpush.msra.mxu0 %v68
    %1210 = vmatpush.msra.mxu0 %v64
    %1211 = vmatpush.msra.mxu0 %v60
    %1212 = vmatpush.msra.mxu0 %v56
    %1213 = vmatpush.msra.mxu0 %v52
    %1214 = vmatpush.msra.mxu0 %v48
    %1215 = vmatpush.msra.mxu0 %v44
    %1216 = vmatpush.msra.mxu0 %v40
    %1217 = vmatmul.f32.gmra.mxu0 %v1200
    %v1218 = vpop.f32.mrf.mxu0
    %v1219 = vadd.f32 0.0, %v1218
    %1220 = vdwg.mxu0
    %1221 = vmatpush.msra.mxu0 %v101
    %1222 = vmatpush.msra.mxu0 %v97
    %1223 = vmatpush.msra.mxu0 %v93
    %1224 = vmatpush.msra.mxu0 %v89
    %1225 = vmatpush.msra.mxu0 %v85
    %1226 = vmatpush.msra.mxu0 %v81
    %1227 = vmatpush.msra.mxu0 %v77
    %1228 = vmatpush.msra.mxu0 %v73
    %1229 = vmatpush.msra.mxu0 %v69
    %1230 = vmatpush.msra.mxu0 %v65
    %1231 = vmatpush.msra.mxu0 %v61
    %1232 = vmatpush.msra.mxu0 %v57
    %1233 = vmatpush.msra.mxu0 %v53
    %1234 = vmatpush.msra.mxu0 %v49
    %1235 = vmatpush.msra.mxu0 %v45
    %1236 = vmatpush.msra.mxu0 %v41
    %1237 = vmatmul.f32.gmra.mxu0 %v1200
    %v1238 = vpop.f32.mrf.mxu0
    %v1239 = vadd.f32 0.0, %v1238
    %1240 = vdwg.mxu0
    %1241 = vmatpush.msra.mxu0 %v102
    %1242 = vmatpush.msra.mxu0 %v98
    %1243 = vmatpush.msra.mxu0 %v94
    %1244 = vmatpush.msra.mxu0 %v90
    %1245 = vmatpush.msra.mxu0 %v86
    %1246 = vmatpush.msra.mxu0 %v82
    %1247 = vmatpush.msra.mxu0 %v78
    %1248 = vmatpush.msra.mxu0 %v74
    %1249 = vmatpush.msra.mxu0 %v70
    %1250 = vmatpush.msra.mxu0 %v66
    %1251 = vmatpush.msra.mxu0 %v62
    %1252 = vmatpush.msra.mxu0 %v58
    %1253 = vmatpush.msra.mxu0 %v54
    %1254 = vmatpush.msra.mxu0 %v50
    %1255 = vmatpush.msra.mxu0 %v46
    %1256 = vmatpush.msra.mxu0 %v42
    %1257 = vmatmul.f32.gmra.mxu0 %v1200
    %v1258 = vpop.f32.mrf.mxu0
    %v1259 = vadd.f32 0.0, %v1258
    %1260 = vdwg.mxu0
    %1261 = vmatpush.msra.mxu0 %v103
    %1262 = vmatpush.msra.mxu0 %v99
    %1263 = vmatpush.msra.mxu0 %v95
    %1264 = vmatpush.msra.mxu0 %v91
    %1265 = vmatpush.msra.mxu0 %v87
    %1266 = vmatpush.msra.mxu0 %v83
    %1267 = vmatpush.msra.mxu0 %v79
    %1268 = vmatpush.msra.mxu0 %v75
    %1269 = vmatpush.msra.mxu0 %v71
    %1270 = vmatpush.msra.mxu0 %v67
    %1271 = vmatpush.msra.mxu0 %v63
    %1272 = vmatpush.msra.mxu0 %v59
    %1273 = vmatpush.msra.mxu0 %v55
    %1274 = vmatpush.msra.mxu0 %v51
    %1275 = vmatpush.msra.mxu0 %v47
    %1276 = vmatpush.msra.mxu0 %v43
    %1277 = vmatmul.f32.gmra.mxu0 %v1200
    %v1278 = vpop.f32.mrf.mxu0
    %v1279 = vadd.f32 0.0, %v1278
    %1280 = vdwg.mxu0
    %v1281 = vadd.f32 %v191, %v1219
    %v1282 = vadd.f32 %v232, %v1239
    %v1283 = vadd.f32 %v273, %v1259
    %v1284 = vadd.f32 %v314, %v1279
    %v1285 = vxor.u32 %v1281, 2147483648
    %v1286 = vmul.f32 %v1285, 1.442695
    %v1287 = vpow.pop %v1286
    %v1288 = vadd.f32 %v1287, 1.0
    %v1289 = vrcp.pop %v1288
    %v1290 = vmul.f32 %v1288, %v1289
    %v1291 = vsub.f32 1.0, %v1290
    %v1292 = vmul.f32 %v1289, %v1291
    %v1293 = vadd.f32 %v1289, %v1292
    %vm1294 = vweird.f32 %v1288
    %vm1295 = vweird.f32 %v1289
    %vm1296 = vmor %vm1294, %vm1295
    %v1297 = vsel %vm1296, %v1289, %v1293
    %v1298 = vand.u32 2147483647, %v1288
    %vm1299 = vcmp.eq.f32.partialorder %v1298, 8.507059e+37
    %v1300 = vand.u32 %v1288, 2147483648
    %v1301 = vor.u32 1.1754944e-38, %v1300
    %v1302 = vsel %vm1299, %v1301, %v1297
    %v1303 = vmul.f32 1.0, %v1302
    %v1304 = vxor.u32 %v1282, 2147483648
    %v1305 = vmul.f32 %v1304, 1.442695
    %v1306 = vpow.pop %v1305
    %v1307 = vadd.f32 %v1306, 1.0
    %v1308 = vrcp.pop %v1307
    %v1309 = vmul.f32 %v1307, %v1308
    %v1310 = vsub.f32 1.0, %v1309
    %v1311 = vmul.f32 %v1308, %v1310
    %v1312 = vadd.f32 %v1308, %v1311
    %vm1313 = vweird.f32 %v1307
    %vm1314 = vweird.f32 %v1308
    %vm1315 = vmor %vm1313, %vm1314
    %v1316 = vsel %vm1315, %v1308, %v1312
    %v1317 = vand.u32 2147483647, %v1307
    %vm1318 = vcmp.eq.f32.partialorder %v1317, 8.507059e+37
    %v1319 = vand.u32 %v1307, 2147483648
    %v1320 = vor.u32 1.1754944e-38, %v1319
    %v1321 = vsel %vm1318, %v1320, %v1316
    %v1322 = vmul.f32 1.0, %v1321
    %v1323 = vtanh.pop %v1283
    %v1324 = vxor.u32 %v1284, 2147483648
    %v1325 = vmul.f32 %v1324, 1.442695
    %v1326 = vpow.pop %v1325
    %v1327 = vadd.f32 %v1326, 1.0
    %v1328 = vrcp.pop %v1327
    %v1329 = vmul.f32 %v1327, %v1328
    %v1330 = vsub.f32 1.0, %v1329
    %v1331 = vmul.f32 %v1328, %v1330
    %v1332 = vadd.f32 %v1328, %v1331
    %vm1333 = vweird.f32 %v1327
    %vm1334 = vweird.f32 %v1328
    %vm1335 = vmor %vm1333, %vm1334
    %v1336 = vsel %vm1335, %v1328, %v1332
    %v1337 = vand.u32 2147483647, %v1327
    %vm1338 = vcmp.eq.f32.partialorder %v1337, 8.507059e+37
    %v1339 = vand.u32 %v1327, 2147483648
    %v1340 = vor.u32 1.1754944e-38, %v1339
    %v1341 = vsel %vm1338, %v1340, %v1336
    %v1342 = vmul.f32 1.0, %v1341
    %v1343 = vmul.f32 %v1322, %v1198
    %v1344 = vmul.f32 %v1303, %v1323
    %v1345 = vadd.f32 %v1343, %v1344
    %v1346 = vtanh.pop %v1345
    %v1347 = vmul.f32 %v1342, %v1346
    %1348 = vmatpush.msra.mxu0 %v100
    %1349 = vmatpush.msra.mxu0 %v96
    %1350 = vmatpush.msra.mxu0 %v92
    %1351 = vmatpush.msra.mxu0 %v88
    %1352 = vmatpush.msra.mxu0 %v84
    %1353 = vmatpush.msra.mxu0 %v80
    %1354 = vmatpush.msra.mxu0 %v76
    %1355 = vmatpush.msra.mxu0 %v72
    %1356 = vmatpush.msra.mxu0 %v68
    %1357 = vmatpush.msra.mxu0 %v64
    %1358 = vmatpush.msra.mxu0 %v60
    %1359 = vmatpush.msra.mxu0 %v56
    %1360 = vmatpush.msra.mxu0 %v52
    %1361 = vmatpush.msra.mxu0 %v48
    %1362 = vmatpush.msra.mxu0 %v44
    %1363 = vmatpush.msra.mxu0 %v40
    %1364 = vmatmul.f32.gmra.mxu0 %v1347
    %v1365 = vpop.f32.mrf.mxu0
    %v1366 = vadd.f32 0.0, %v1365
    %1367 = vdwg.mxu0
    %1368 = vmatpush.msra.mxu0 %v101
    %1369 = vmatpush.msra.mxu0 %v97
    %1370 = vmatpush.msra.mxu0 %v93
    %1371 = vmatpush.msra.mxu0 %v89
    %1372 = vmatpush.msra.mxu0 %v85
    %1373 = vmatpush.msra.mxu0 %v81
    %1374 = vmatpush.msra.mxu0 %v77
    %1375 = vmatpush.msra.mxu0 %v73
    %1376 = vmatpush.msra.mxu0 %v69
    %1377 = vmatpush.msra.mxu0 %v65
    %1378 = vmatpush.msra.mxu0 %v61
    %1379 = vmatpush.msra.mxu0 %v57
    %1380 = vmatpush.msra.mxu0 %v53
    %1381 = vmatpush.msra.mxu0 %v49
    %1382 = vmatpush.msra.mxu0 %v45
    %1383 = vmatpush.msra.mxu0 %v41
    %1384 = vmatmul.f32.gmra.mxu0 %v1347
    %v1385 = vpop.f32.mrf.mxu0
    %v1386 = vadd.f32 0.0, %v1385
    %1387 = vdwg.mxu0
    %1388 = vmatpush.msra.mxu0 %v102
    %1389 = vmatpush.msra.mxu0 %v98
    %1390 = vmatpush.msra.mxu0 %v94
    %1391 = vmatpush.msra.mxu0 %v90
    %1392 = vmatpush.msra.mxu0 %v86
    %1393 = vmatpush.msra.mxu0 %v82
    %1394 = vmatpush.msra.mxu0 %v78
    %1395 = vmatpush.msra.mxu0 %v74
    %1396 = vmatpush.msra.mxu0 %v70
    %1397 = vmatpush.msra.mxu0 %v66
    %1398 = vmatpush.msra.mxu0 %v62
    %1399 = vmatpush.msra.mxu0 %v58
    %1400 = vmatpush.msra.mxu0 %v54
    %1401 = vmatpush.msra.mxu0 %v50
    %1402 = vmatpush.msra.mxu0 %v46
    %1403 = vmatpush.msra.mxu0 %v42
    %1404 = vmatmul.f32.gmra.mxu0 %v1347
    %v1405 = vpop.f32.mrf.mxu0
    %v1406 = vadd.f32 0.0, %v1405
    %1407 = vdwg.mxu0
    %1408 = vmatpush.msra.mxu0 %v103
    %1409 = vmatpush.msra.mxu0 %v99
    %1410 = vmatpush.msra.mxu0 %v95
    %1411 = vmatpush.msra.mxu0 %v91
    %1412 = vmatpush.msra.mxu0 %v87
    %1413 = vmatpush.msra.mxu0 %v83
    %1414 = vmatpush.msra.mxu0 %v79
    %1415 = vmatpush.msra.mxu0 %v75
    %1416 = vmatpush.msra.mxu0 %v71
    %1417 = vmatpush.msra.mxu0 %v67
    %1418 = vmatpush.msra.mxu0 %v63
    %1419 = vmatpush.msra.mxu0 %v59
    %1420 = vmatpush.msra.mxu0 %v55
    %1421 = vmatpush.msra.mxu0 %v51
    %1422 = vmatpush.msra.mxu0 %v47
    %1423 = vmatpush.msra.mxu0 %v43
    %1424 = vmatmul.f32.gmra.mxu0 %v1347
    %v1425 = vpop.f32.mrf.mxu0
    %v1426 = vadd.f32 0.0, %v1425
    %1427 = vdwg.mxu0
    %v1428 = vadd.f32 %v194, %v1366
    %v1429 = vadd.f32 %v235, %v1386
    %v1430 = vadd.f32 %v276, %v1406
    %v1431 = vadd.f32 %v317, %v1426
    %v1432 = vxor.u32 %v1428, 2147483648
    %v1433 = vmul.f32 %v1432, 1.442695
    %v1434 = vpow.pop %v1433
    %v1435 = vadd.f32 %v1434, 1.0
    %v1436 = vrcp.pop %v1435
    %v1437 = vmul.f32 %v1435, %v1436
    %v1438 = vsub.f32 1.0, %v1437
    %v1439 = vmul.f32 %v1436, %v1438
    %v1440 = vadd.f32 %v1436, %v1439
    %vm1441 = vweird.f32 %v1435
    %vm1442 = vweird.f32 %v1436
    %vm1443 = vmor %vm1441, %vm1442
    %v1444 = vsel %vm1443, %v1436, %v1440
    %v1445 = vand.u32 2147483647, %v1435
    %vm1446 = vcmp.eq.f32.partialorder %v1445, 8.507059e+37
    %v1447 = vand.u32 %v1435, 2147483648
    %v1448 = vor.u32 1.1754944e-38, %v1447
    %v1449 = vsel %vm1446, %v1448, %v1444
    %v1450 = vmul.f32 1.0, %v1449
    %v1451 = vxor.u32 %v1429, 2147483648
    %v1452 = vmul.f32 %v1451, 1.442695
    %v1453 = vpow.pop %v1452
    %v1454 = vadd.f32 %v1453, 1.0
    %v1455 = vrcp.pop %v1454
    %v1456 = vmul.f32 %v1454, %v1455
    %v1457 = vsub.f32 1.0, %v1456
    %v1458 = vmul.f32 %v1455, %v1457
    %v1459 = vadd.f32 %v1455, %v1458
    %vm1460 = vweird.f32 %v1454
    %vm1461 = vweird.f32 %v1455
    %vm1462 = vmor %vm1460, %vm1461
    %v1463 = vsel %vm1462, %v1455, %v1459
    %v1464 = vand.u32 2147483647, %v1454
    %vm1465 = vcmp.eq.f32.partialorder %v1464, 8.507059e+37
    %v1466 = vand.u32 %v1454, 2147483648
    %v1467 = vor.u32 1.1754944e-38, %v1466
    %v1468 = vsel %vm1465, %v1467, %v1463
    %v1469 = vmul.f32 1.0, %v1468
    %v1470 = vtanh.pop %v1430
    %v1471 = vxor.u32 %v1431, 2147483648
    %v1472 = vmul.f32 %v1471, 1.442695
    %v1473 = vpow.pop %v1472
    %v1474 = vadd.f32 %v1473, 1.0
    %v1475 = vrcp.pop %v1474
    %v1476 = vmul.f32 %v1474, %v1475
    %v1477 = vsub.f32 1.0, %v1476
    %v1478 = vmul.f32 %v1475, %v1477
    %v1479 = vadd.f32 %v1475, %v1478
    %vm1480 = vweird.f32 %v1474
    %vm1481 = vweird.f32 %v1475
    %vm1482 = vmor %vm1480, %vm1481
    %v1483 = vsel %vm1482, %v1475, %v1479
    %v1484 = vand.u32 2147483647, %v1474
    %vm1485 = vcmp.eq.f32.partialorder %v1484, 8.507059e+37
    %v1486 = vand.u32 %v1474, 2147483648
    %v1487 = vor.u32 1.1754944e-38, %v1486
    %v1488 = vsel %vm1485, %v1487, %v1483
    %v1489 = vmul.f32 1.0, %v1488
    %v1490 = vmul.f32 %v1469, %v1345
    %v1491 = vmul.f32 %v1450, %v1470
    %v1492 = vadd.f32 %v1490, %v1491
    %v1493 = vtanh.pop %v1492
    %v1494 = vmul.f32 %v1489, %v1493
    %v1495 = vld [vmem:[%s4] sm:$0xff]
    %v1496 = vld [vmem:[%s4 + $0x8] sm:$0xff]
    %v1497 = vld [vmem:[%s4 + $0x10] sm:$0xff]
    %v1498 = vld [vmem:[%s4 + $0x18] sm:$0xff]
    %v1499 = vld [vmem:[%s4 + $0x20] sm:$0xff]
    %v1500 = vld [vmem:[%s4 + $0x28] sm:$0xff]
    %v1501 = vld [vmem:[%s4 + $0x30] sm:$0xff]
    %v1502 = vld [vmem:[%s4 + $0x38] sm:$0xff]
    %v1503 = vld [vmem:[%s4 + $0x40] sm:$0xff]
    %v1504 = vld [vmem:[%s4 + $0x48] sm:$0xff]
    %v1505 = vld [vmem:[%s4 + $0x50] sm:$0xff]
    %v1506 = vld [vmem:[%s4 + $0x58] sm:$0xff]
    %v1507 = vld [vmem:[%s4 + $0x60] sm:$0xff]
    %v1508 = vld [vmem:[%s4 + $0x68] sm:$0xff]
    %v1509 = vld [vmem:[%s4 + $0x70] sm:$0xff]
    %v1510 = vld [vmem:[%s4 + $0x78] sm:$0xff]
    %v1511 = vld [vmem:[%s5] sm:$0x1]
    %v1513 = vperm.slane %v1511, 0
    %1515 = vmatpush.msra.mxu0 %v1510
    %1516 = vmatpush.msra.mxu0 %v1509
    %1517 = vmatpush.msra.mxu0 %v1508
    %1518 = vmatpush.msra.mxu0 %v1507
    %1519 = vmatpush.msra.mxu0 %v1506
    %1520 = vmatpush.msra.mxu0 %v1505
    %1521 = vmatpush.msra.mxu0 %v1504
    %1522 = vmatpush.msra.mxu0 %v1503
    %1523 = vmatpush.msra.mxu0 %v1502
    %1524 = vmatpush.msra.mxu0 %v1501
    %1525 = vmatpush.msra.mxu0 %v1500
    %1526 = vmatpush.msra.mxu0 %v1499
    %1527 = vmatpush.msra.mxu0 %v1498
    %1528 = vmatpush.msra.mxu0 %v1497
    %1529 = vmatpush.msra.mxu0 %v1496
    %1530 = vmatpush.msra.mxu0 %v1495
    %1531 = vmatmul.f32.gmra.mxu0 %v1494
    %v1532 = vpop.f32.mrf.mxu0
    %v1533 = vadd.f32 %v1513, %v1532
    %1534 = vdwg.mxu0
    %1535 = vst.msk [vmem:[#allocation5] sm:$0xff] %vm130, %v1533
    // Predicated region
    $region30: #{tpu_custom_call.1} parent=1 // pred_check
      _
    $region31: #{tpu_custom_call.1} parent=1 // pred_check_branch
      %1537 = sbr.rel (0) target = $region33
    $region32: #{tpu_custom_call.1} parent=1 // pred_region
      %1539 = vsyncadd [#allocation4], 0
      %s1541 = sshll.u32 [#allocation5], 4
      %s1542 = int_to_ptr.vmem [resolvable:$true] %s1541
      %s1543 = sshll.u32 %s6, 4
      %s1544 = int_to_ptr.hbm [resolvable:$true] %s1543
      %1546 = dma.vmem_to_hbm [thread:$0]  %s1542, 128, %s1544, [#allocation4]
    $region33: #{tpu_custom_call.1} parent=1 // pred_fallthru
      _
    // Predicated region
    $region34: #{tpu_custom_call.1} parent=1 // pred_check
      _
    $region35: #{tpu_custom_call.1} parent=1 // pred_check_branch
      %1548 = sbr.rel (0) target = $region37
    $region36: #{tpu_custom_call.1} parent=1 // pred_region
      %1550 = dma.done [#allocation4], 128
    $region37: #{tpu_custom_call.1} parent=1 // pred_fallthru
      _
    %1551 = vsyncpa [#allocation3], 1
    %1552 = vsyncpa [#allocation4], 1

</llo_original>
